<compile_context>
chip_gen: v5e
topology: v5e:2x2
jax: 0.10.0
libtpu: 0.0.40
codegen_flags: <defaults>
</compile_context>

<pallas_src>
import functools

import numpy as np

import jax
import jax.numpy as jnp
from jax import lax
from jax.experimental import pallas as pl
from jax.experimental.pallas import tpu as pltpu

BN_EPS = 1e-5
BN_SCALE = 1.0 / float(np.sqrt(1.0 + BN_EPS))  # gamma=1, beta=0, mean=0, var=1
MXU_DTYPE = jnp.bfloat16                       # MXU operand dtype (f32 accum)

_TAPS = [(dy, dx) for dy in range(3) for dx in range(3)]  # k = dy*3 + dx


def _round_up(v, m):
    return -(-v // m) * m


# ----------------------------------------------------------------------------
# Host-side constants (built at trace time with numpy -> folded, no HBM passes)
# ----------------------------------------------------------------------------
def _edge_masks(h, w):
    """(2, H*W) f32: row 0 zeroes x == 0 (left tap), row 1 zeroes x == W-1."""
    col = np.arange(h * w) % w
    return jnp.asarray(np.stack([(col != 0), (col != w - 1)]).astype(np.float32))


def _stride2_select(h, w, ho, wo):
    """(H*W, Ho*Wo) 0/1 matrix selecting stride-2 output positions."""
    sel = np.zeros((h * w, ho * wo), np.float32)
    for yo in range(ho):
        for xo in range(wo):
            sel[(2 * yo) * w + 2 * xo, yo * wo + xo] = 1.0
    return jnp.asarray(sel)


# ----------------------------------------------------------------------------
# In-kernel helper: 3x3 conv (pad 1) as 9 accumulate-dots over a padded buffer
# ----------------------------------------------------------------------------
def _conv3x3_from_buf(buf_ref, w2_ref, b2_ref, edge, hw, w, padf, midp):
    """buf_ref: (midp, 2*padf+hw) zero-padded flat h1; returns f32 (midp, hw)."""
    mask_l = edge[0:1, :]
    mask_r = edge[1:2, :]
    acc = jnp.zeros((midp, hw), jnp.float32) + b2_ref[...]
    for k, (dy, dx) in enumerate(_TAPS):
        off = padf + (dy - 1) * w + (dx - 1)
        t = buf_ref[:, off:off + hw]
        if dx == 0:
            t = t * mask_l            # zero wrapped left-edge columns
        elif dx == 2:
            t = t * mask_r            # zero wrapped right-edge columns
        acc = acc + jnp.dot(w2_ref[k], t.astype(MXU_DTYPE),
                            preferred_element_type=jnp.float32)
    return acc


# ----------------------------------------------------------------------------
# Fused stride-1 unit: conv1x1 -> 3x3 -> conv1x1 + residual + ReLU6
# ----------------------------------------------------------------------------
def _unit_stride1(params, xf, h, w):
    n, cin, hw = xf.shape
    midp = params["w1"].shape[0]
    cout = params["w3"].shape[0]
    assert cout == cin, "stride-1 unit needs out_channels == in_channels"
    padf = _round_up(w + 1, 128)            # interior store lane-aligned
    buf_len = hw + 2 * padf
    edge_const = _edge_masks(h, w)

    def kernel(x_ref, w1_ref, b1_ref, w2_ref, b2_ref, w3_ref, b3_ref,
               edge_ref, o_ref, h1buf):
        x = x_ref[0]                                            # (cin, hw) f32
        edge = edge_ref[...]
        # Conv1x1BNReLU (ChannelShuffle + BN folded into w1/b1)
        h1 = jnp.dot(w1_ref[...], x.astype(MXU_DTYPE),
                     preferred_element_type=jnp.float32) + b1_ref[...]
        h1 = jnp.clip(h1, 0.0, 6.0)
        # in-kernel zero padding for the 3x3 taps
        h1buf[...] = jnp.zeros_like(h1buf)
        h1buf[:, padf:padf + hw] = h1
        # Conv3x3BNReLU (stride 1)
        h2 = jnp.clip(_conv3x3_from_buf(h1buf, w2_ref, b2_ref, edge,
                                        hw, w, padf, midp), 0.0, 6.0)
        # Conv1x1BN + residual (f32) + ReLU6; single lane-dense store
        out = jnp.dot(w3_ref[...], h2.astype(MXU_DTYPE),
                      preferred_element_type=jnp.float32) + b3_ref[...] + x
        o_ref[0] = jnp.clip(out, 0.0, 6.0)

    return pl.pallas_call(
        kernel,
        out_shape=jax.ShapeDtypeStruct((n, cout, hw), jnp.float32),
        grid=(n,),
        in_specs=[
            pl.BlockSpec((1, cin, hw), lambda i: (i, 0, 0)),
            pl.BlockSpec((midp, cin), lambda i: (0, 0)),
            pl.BlockSpec((midp, 1), lambda i: (0, 0)),
            pl.BlockSpec((9, midp, midp), lambda i: (0, 0, 0)),
            pl.BlockSpec((midp, 1), lambda i: (0, 0)),
            pl.BlockSpec((cout, midp), lambda i: (0, 0)),
            pl.BlockSpec((cout, 1), lambda i: (0, 0)),
            pl.BlockSpec((2, hw), lambda i: (0, 0)),
        ],
        out_specs=pl.BlockSpec((1, cout, hw), lambda i: (i, 0, 0)),
        scratch_shapes=[pltpu.VMEM((midp, buf_len), jnp.float32)],
        compiler_params=pltpu.CompilerParams(
            dimension_semantics=("parallel",)),
    )(xf, params["w1"], params["b1"], params["w2"], params["b2"],
      params["w3"], params["b3"], edge_const)


# ----------------------------------------------------------------------------
# Fused stride-2 unit: conv1x1 -> 3x3 s2 -> conv1x1 | AvgPool shortcut | concat
# ----------------------------------------------------------------------------
def _unit_stride2(params, xf, h, w, ho, wo):
    n, cin, hw = xf.shape
    howo = ho * wo
    midp = params["w1"].shape[0]
    cob = params["w3"].shape[0]
    ctot = cin + cob
    padf = _round_up(w + 1, 128)
    buf_len = hw + 2 * padf
    edge_const = _edge_masks(h, w)
    sel_const = _stride2_select(h, w, ho, wo)

    def kernel(x_ref, w1_ref, b1_ref, w2_ref, b2_ref, w3_ref, b3_ref,
               edge_ref, sel_ref, o_ref, h1buf, xbuf):
        x = x_ref[0]                                            # (cin, hw) f32
        edge = edge_ref[...]
        sel_m = sel_ref[...]                                    # (hw, howo) f32
        mask_l = edge[0:1, :]
        mask_r = edge[1:2, :]

        # ---- shortcut: AvgPool2d(3, stride=2, pad=1), count_include_pad ----
        xbuf[...] = jnp.zeros_like(xbuf)
        xbuf[:, padf:padf + hw] = x
        psum = jnp.zeros((cin, hw), jnp.float32)
        for dy, dx in _TAPS:
            off = padf + (dy - 1) * w + (dx - 1)
            t = xbuf[:, off:off + hw]
            if dx == 0:
                t = t * mask_l
            elif dx == 2:
                t = t * mask_r
            psum = psum + t
        pool = jnp.dot(psum, sel_m,
                       preferred_element_type=jnp.float32) * (1.0 / 9.0)

        # ---- bottleneck path ----
        h1 = jnp.dot(w1_ref[...], x.astype(MXU_DTYPE),
                     preferred_element_type=jnp.float32) + b1_ref[...]
        h1 = jnp.clip(h1, 0.0, 6.0)
        h1buf[...] = jnp.zeros_like(h1buf)
        h1buf[:, padf:padf + hw] = h1
        h2 = jnp.clip(_conv3x3_from_buf(h1buf, w2_ref, b2_ref, edge,
                                        hw, w, padf, midp), 0.0, 6.0)
        h2s = jnp.dot(h2, sel_m, preferred_element_type=jnp.float32)
        outb = jnp.dot(w3_ref[...], h2s.astype(MXU_DTYPE),
                       preferred_element_type=jnp.float32) + b3_ref[...]

        # ---- fused concat([pool, outb]) + ReLU6: direct sub-range stores ----
        o_ref[0, 0:cin, :] = jnp.clip(pool, 0.0, 6.0)
        o_ref[0, cin:ctot, :] = jnp.clip(outb, 0.0, 6.0)

    return pl.pallas_call(
        kernel,
        out_shape=jax.ShapeDtypeStruct((n, ctot, howo), jnp.float32),
        grid=(n,),
        in_specs=[
            pl.BlockSpec((1, cin, hw), lambda i: (i, 0, 0)),
            pl.BlockSpec((midp, cin), lambda i: (0, 0)),
            pl.BlockSpec((midp, 1), lambda i: (0, 0)),
            pl.BlockSpec((9, midp, midp), lambda i: (0, 0, 0)),
            pl.BlockSpec((midp, 1), lambda i: (0, 0)),
            pl.BlockSpec((cob, midp), lambda i: (0, 0)),
            pl.BlockSpec((cob, 1), lambda i: (0, 0)),
            pl.BlockSpec((2, hw), lambda i: (0, 0)),
            pl.BlockSpec((hw, howo), lambda i: (0, 0)),
        ],
        out_specs=pl.BlockSpec((1, ctot, howo), lambda i: (i, 0, 0)),
        scratch_shapes=[pltpu.VMEM((midp, buf_len), jnp.float32),
                        pltpu.VMEM((cin, buf_len), jnp.float32)],
        compiler_params=pltpu.CompilerParams(
            dimension_semantics=("parallel",)),
    )(xf, params["w1"], params["b1"], params["w2"], params["b2"],
      params["w3"], params["b3"], edge_const, sel_const)


# ----------------------------------------------------------------------------
# ShuffleNetUnits forward
# ----------------------------------------------------------------------------
def shufflenet_unit(params, x, *, stride):
    """Forward of the PyTorch ShuffleNetUnits module (inference-mode BN)."""
    n, cin, h, w = x.shape
    xf = x.reshape(n, cin, h * w).astype(jnp.float32)
    if stride == 1:
        out = _unit_stride1(params, xf, h, w)
        return out.reshape(n, out.shape[1], h, w)
    ho = (h + 2 - 3) // 2 + 1
    wo = (w + 2 - 3) // 2 + 1
    out = _unit_stride2(params, xf, h, w, ho, wo)
    return out.reshape(n, out.shape[1], ho, wo)


# ----------------------------------------------------------------------------
# Deterministic parameters (grouped convs -> dense block-diag, BN + shuffle
# folded, mid channels zero-padded to 16)
# ----------------------------------------------------------------------------
def _grouped_1x1_dense(key, cin, cout, groups):
    cin_g, cout_g = cin // groups, cout // groups
    std = (2.0 / cin_g) ** 0.5
    wg = jax.random.normal(key, (cout, cin_g), jnp.float32) * std
    dense = jnp.zeros((cout, cin), jnp.float32)
    for g in range(groups):
        dense = dense.at[g * cout_g:(g + 1) * cout_g,
                         g * cin_g:(g + 1) * cin_g].set(
                             wg[g * cout_g:(g + 1) * cout_g])
    return dense


def _grouped_3x3_dense(key, cin, cout, groups):
    cin_g, cout_g = cin // groups, cout // groups
    std = (2.0 / (cin_g * 9)) ** 0.5
    wg = jax.random.normal(key, (cout, cin_g, 3, 3), jnp.float32) * std
    dense = jnp.zeros((cout, cin, 3, 3), jnp.float32)
    for g in range(groups):
        dense = dense.at[g * cout_g:(g + 1) * cout_g,
                         g * cin_g:(g + 1) * cin_g].set(
                             wg[g * cout_g:(g + 1) * cout_g])
    return dense


def make_unit_params(key, in_ch, out_ch, stride, groups):
    out_b = out_ch - in_ch if stride > 1 else out_ch
    mid = out_b // 4
    assert in_ch % groups == 0 and mid % groups == 0 and out_b % groups == 0
    assert in_ch % 8 == 0 and out_b % 8 == 0
    midp = _round_up(mid, 16)   # bf16 sublane packing (zero-padded, exact)

    k1, k2, k3, kb1, kb2, kb3 = jax.random.split(key, 6)

    # Conv1x1BNReLU: BN scale folded; ChannelShuffle folded as an output-row
    # permutation (zero runtime cost).
    w1 = _grouped_1x1_dense(k1, in_ch, mid, groups) * BN_SCALE
    b1 = jax.random.normal(kb1, (mid,), jnp.float32) * 0.05 * BN_SCALE
    perm = np.arange(mid).reshape(groups, mid // groups).T.reshape(-1)
    w1, b1 = w1[perm], b1[perm]
    w1p = jnp.zeros((midp, in_ch), jnp.float32).at[:mid].set(w1)
    b1p = jnp.zeros((midp,), jnp.float32).at[:mid].set(b1)

    # Conv3x3BNReLU (grouped, acting on the shuffled channel order)
    w2 = _grouped_3x3_dense(k2, mid, mid, groups) * BN_SCALE
    b2 = jax.random.normal(kb2, (mid,), jnp.float32) * 0.05 * BN_SCALE
    w2p = jnp.zeros((midp, midp, 3, 3), jnp.float32).at[:mid, :mid].set(w2)
    b2p = jnp.zeros((midp,), jnp.float32).at[:mid].set(b2)
    w2k = jnp.transpose(w2p, (2, 3, 0, 1)).reshape(9, midp, midp)  # k=dy*3+dx

    # Conv1x1BN
    w3 = _grouped_1x1_dense(k3, mid, out_b, groups) * BN_SCALE
    b3 = jax.random.normal(kb3, (out_b,), jnp.float32) * 0.05 * BN_SCALE
    w3p = jnp.zeros((out_b, midp), jnp.float32).at[:, :mid].set(w3)

    return {
        "w1": w1p.astype(MXU_DTYPE), "b1": b1p.reshape(midp, 1),
        "w2": w2k.astype(MXU_DTYPE), "b2": b2p.reshape(midp, 1),
        "w3": w3p.astype(MXU_DTYPE), "b3": b3.reshape(out_b, 1),
    }


# ----------------------------------------------------------------------------
# Pure-JAX reference (same operand precision as the kernels)
# ----------------------------------------------------------------------------
def ref_unit(params, x, *, stride):
    f32 = jnp.float32
    midp = params["w1"].shape[0]
    b1 = params["b1"].reshape(1, -1, 1, 1)
    b2 = params["b2"].reshape(1, -1, 1, 1)
    b3 = params["b3"].reshape(1, -1, 1, 1)
    h1 = jnp.einsum("oc,nchw->nohw", params["w1"], x.astype(MXU_DTYPE),
                    preferred_element_type=f32) + b1
    h1 = jnp.clip(h1, 0.0, 6.0)
    w2 = jnp.transpose(params["w2"].reshape(3, 3, midp, midp), (2, 3, 0, 1))
    h2 = lax.conv_general_dilated(
        h1.astype(MXU_DTYPE), w2, window_strides=(stride, stride),
        padding=((1, 1), (1, 1)), dimension_numbers=("NCHW", "OIHW", "NCHW"),
        preferred_element_type=f32) + b2
    h2 = jnp.clip(h2, 0.0, 6.0)
    out = jnp.einsum("oc,nchw->nohw", params["w3"], h2.astype(MXU_DTYPE),
                     preferred_element_type=f32) + b3
    if stride == 1:
        return jnp.clip(out + x, 0.0, 6.0)
    pool = lax.reduce_window(x, 0.0, lax.add, (1, 1, 3, 3), (1, 1, 2, 2),
                             ((0, 0), (0, 0), (1, 1), (1, 1))) * (1.0 / 9.0)
    return jnp.clip(jnp.concatenate([pool, out], axis=1), 0.0, 6.0)


# ----------------------------------------------------------------------------
if __name__ == "__main__":
    N, C, H, W = 2, 32, 16, 16
    GROUPS = 2
    root = jax.random.PRNGKey(0)
    kx, kp1, kp2 = jax.random.split(root, 3)
    x = jax.random.normal(kx, (N, C, H, W), dtype=jnp.float32)

    # stride-1 unit (residual add) and stride-2 unit (pool shortcut + concat)
    p_s1 = make_unit_params(kp1, C, C, stride=1, groups=GROUPS)
    p_s2 = make_unit_params(kp2, C, 2 * C, stride=2, groups=GROUPS)

    unit_s1 = jax.jit(functools.partial(shufflenet_unit, stride=1))
    unit_s2 = jax.jit(functools.partial(shufflenet_unit, stride=2))

    y1 = unit_s1(p_s1, x)
    y2 = unit_s2(p_s2, x)
    jax.block_until_ready((y1, y2))

    assert y1.shape == (N, C, H, W), y1.shape
    assert y2.shape == (N, 2 * C, H // 2, W // 2), y2.shape

    # Numerical check against the pure-JAX reference (matching MXU precision).
    r1 = ref_unit(p_s1, x, stride=1)
    r2 = ref_unit(p_s2, x, stride=2)
    np.testing.assert_allclose(np.asarray(y1), np.asarray(r1),
                               rtol=5e-2, atol=5e-2)
    np.testing.assert_allclose(np.asarray(y2), np.asarray(r2),
                               rtol=5e-2, atol=5e-2)
    assert bool(jnp.all(jnp.isfinite(y1))) and bool(jnp.all(jnp.isfinite(y2)))
    assert float(jnp.min(y1)) >= 0.0 and float(jnp.max(y1)) <= 6.0
    assert float(jnp.min(y2)) >= 0.0 and float(jnp.max(y2)) <= 6.0
    print("KERNEL_OK")
</pallas_src>

<mosaic_0001>
module attributes {stable_mosaic.version = 11 : i64} {
  func.func @kernel(%arg0: i32, %arg1: memref<1x32x256xf32, #tpu.memory_space<vmem>>, %arg2: memref<16x32xbf16, #tpu.memory_space<vmem>>, %arg3: memref<16x1xf32, #tpu.memory_space<vmem>>, %arg4: memref<9x16x16xbf16, #tpu.memory_space<vmem>>, %arg5: memref<16x1xf32, #tpu.memory_space<vmem>>, %arg6: memref<32x16xbf16, #tpu.memory_space<vmem>>, %arg7: memref<32x1xf32, #tpu.memory_space<vmem>>, %arg8: memref<2x256xf32, #tpu.memory_space<vmem>>, %arg9: memref<1x32x256xf32, #tpu.memory_space<vmem>>, %arg10: memref<16x512xf32, #tpu.memory_space<vmem>>) attributes {dimension_semantics = [#tpu.dimension_semantics<parallel>], iteration_bounds = array<i64: 2>, scalar_prefetch = 0 : i64, scratch_operands = 1 : i64, tpu.core_type = #tpu.core_type<tc>, window_params = [{transform_indices = @transform_0, window_bounds = array<i64: 1, 32, 256>}, {pipeline_mode = #tpu.pipeline_mode<synchronous>, transform_indices = @transform_1, window_bounds = array<i64: 16, 32>}, {pipeline_mode = #tpu.pipeline_mode<synchronous>, transform_indices = @transform_2, window_bounds = array<i64: 16, 1>}, {pipeline_mode = #tpu.pipeline_mode<synchronous>, transform_indices = @transform_3, window_bounds = array<i64: 9, 16, 16>}, {pipeline_mode = #tpu.pipeline_mode<synchronous>, transform_indices = @transform_4, window_bounds = array<i64: 16, 1>}, {pipeline_mode = #tpu.pipeline_mode<synchronous>, transform_indices = @transform_5, window_bounds = array<i64: 32, 16>}, {pipeline_mode = #tpu.pipeline_mode<synchronous>, transform_indices = @transform_6, window_bounds = array<i64: 32, 1>}, {pipeline_mode = #tpu.pipeline_mode<synchronous>, transform_indices = @transform_7, window_bounds = array<i64: 2, 256>}, {transform_indices = @transform_8, window_bounds = array<i64: 1, 32, 256>}]} {
    %c0 = arith.constant 0 : index
    %c0_0 = arith.constant 0 : index
    %c0_1 = arith.constant 0 : index
    %0 = vector.load %arg1[%c0, %c0_0, %c0_1] : memref<1x32x256xf32, #tpu.memory_space<vmem>>, vector<1x32x256xf32>
    %1 = vector.shape_cast %0 : vector<1x32x256xf32> to vector<32x256xf32>
    %c0_2 = arith.constant 0 : index
    %c0_3 = arith.constant 0 : index
    %2 = vector.load %arg8[%c0_2, %c0_3] : memref<2x256xf32, #tpu.memory_space<vmem>>, vector<2x256xf32>
    %c0_4 = arith.constant 0 : index
    %c0_5 = arith.constant 0 : index
    %3 = vector.load %arg2[%c0_4, %c0_5] : memref<16x32xbf16, #tpu.memory_space<vmem>>, vector<16x32xbf16>
    %4 = arith.truncf %1 : vector<32x256xf32> to vector<32x256xbf16>
    %cst = arith.constant dense<0.000000e+00> : vector<16x256xf32>
    %5 = tpu.matmul %3, %4, %cst {dimension_numbers = #tpu.dot_dimension_numbers<[1], [0], [0], [1], [0, 0, 1, 1], [], []>} : vector<16x32xbf16>, vector<32x256xbf16>, vector<16x256xf32> -> vector<16x256xf32>
    %c0_6 = arith.constant 0 : index
    %c0_7 = arith.constant 0 : index
    %6 = vector.load %arg3[%c0_6, %c0_7] : memref<16x1xf32, #tpu.memory_space<vmem>>, vector<16x1xf32>
    %7 = vector.broadcast %6 : vector<16x1xf32> to vector<16x256xf32>
    %8 = arith.addf %5, %7 : vector<16x256xf32>
    %cst_8 = arith.constant 0.000000e+00 : f32
    %cst_9 = arith.constant 6.000000e+00 : f32
    %9 = vector.broadcast %cst_8 : f32 to vector<16x256xf32>
    %10 = arith.maximumf %9, %8 : vector<16x256xf32>
    %11 = vector.broadcast %cst_9 : f32 to vector<16x256xf32>
    %12 = arith.minimumf %11, %10 : vector<16x256xf32>
    %cst_10 = arith.constant 0.000000e+00 : f32
    %13 = vector.broadcast %cst_10 : f32 to vector<16x512xf32>
    %c0_11 = arith.constant 0 : index
    %c0_12 = arith.constant 0 : index
    %14 = vector.load %arg10[%c0_11, %c0_12] : memref<16x512xf32, #tpu.memory_space<vmem>>, vector<16x512xf32>
    tpu.vector_store %arg10[%c0_11, %c0_12], %13 {strides = array<i32>} : memref<16x512xf32, #tpu.memory_space<vmem>>, vector<16x512xf32>,
    %c0_13 = arith.constant 0 : index
    %c128 = arith.constant 128 : index
    %15 = vector.load %arg10[%c0_13, %c128] : memref<16x512xf32, #tpu.memory_space<vmem>>, vector<16x256xf32>
    tpu.vector_store %arg10[%c0_13, %c128], %12 {strides = array<i32>} : memref<16x512xf32, #tpu.memory_space<vmem>>, vector<16x256xf32>,
    %16 = vector.extract_strided_slice %2 {offsets = [0, 0], sizes = [1, 256], strides = [1, 1]} : vector<2x256xf32> to vector<1x256xf32>
    %17 = vector.extract_strided_slice %2 {offsets = [1, 0], sizes = [1, 256], strides = [1, 1]} : vector<2x256xf32> to vector<1x256xf32>
    %cst_14 = arith.constant 0.000000e+00 : f32
    %18 = vector.broadcast %cst_14 : f32 to vector<16x256xf32>
    %c0_15 = arith.constant 0 : index
    %c0_16 = arith.constant 0 : index
    %19 = vector.load %arg5[%c0_15, %c0_16] : memref<16x1xf32, #tpu.memory_space<vmem>>, vector<16x1xf32>
    %20 = vector.broadcast %19 : vector<16x1xf32> to vector<16x256xf32>
    %21 = arith.addf %18, %20 : vector<16x256xf32>
    %c0_17 = arith.constant 0 : index
    %c111 = arith.constant 111 : index
    %22 = vector.load %arg10[%c0_17, %c111] : memref<16x512xf32, #tpu.memory_space<vmem>>, vector<16x256xf32>
    %23 = vector.broadcast %16 : vector<1x256xf32> to vector<16x256xf32>
    %24 = arith.mulf %22, %23 : vector<16x256xf32>
    %c0_18 = arith.constant 0 : index
    %c0_19 = arith.constant 0 : index
    %c0_20 = arith.constant 0 : index
    %25 = vector.load %arg4[%c0_18, %c0_19, %c0_20] : memref<9x16x16xbf16, #tpu.memory_space<vmem>>, vector<1x16x16xbf16>
    %26 = vector.shape_cast %25 : vector<1x16x16xbf16> to vector<16x16xbf16>
    %27 = arith.truncf %24 : vector<16x256xf32> to vector<16x256xbf16>
    %cst_21 = arith.constant dense<0.000000e+00> : vector<16x256xf32>
    %28 = tpu.matmul %26, %27, %cst_21 {dimension_numbers = #tpu.dot_dimension_numbers<[1], [0], [0], [1], [0, 0, 1, 1], [], []>} : vector<16x16xbf16>, vector<16x256xbf16>, vector<16x256xf32> -> vector<16x256xf32>
    %29 = arith.addf %21, %28 : vector<16x256xf32>
    %c0_22 = arith.constant 0 : index
    %c112 = arith.constant 112 : index
    %30 = vector.load %arg10[%c0_22, %c112] : memref<16x512xf32, #tpu.memory_space<vmem>>, vector<16x256xf32>
    %c1 = arith.constant 1 : index
    %c0_23 = arith.constant 0 : index
    %c0_24 = arith.constant 0 : index
    %31 = vector.load %arg4[%c1, %c0_23, %c0_24] : memref<9x16x16xbf16, #tpu.memory_space<vmem>>, vector<1x16x16xbf16>
    %32 = vector.shape_cast %31 : vector<1x16x16xbf16> to vector<16x16xbf16>
    %33 = arith.truncf %30 : vector<16x256xf32> to vector<16x256xbf16>
    %cst_25 = arith.constant dense<0.000000e+00> : vector<16x256xf32>
    %34 = tpu.matmul %32, %33, %cst_25 {dimension_numbers = #tpu.dot_dimension_numbers<[1], [0], [0], [1], [0, 0, 1, 1], [], []>} : vector<16x16xbf16>, vector<16x256xbf16>, vector<16x256xf32> -> vector<16x256xf32>
    %35 = arith.addf %29, %34 : vector<16x256xf32>
    %c0_26 = arith.constant 0 : index
    %c113 = arith.constant 113 : index
    %36 = vector.load %arg10[%c0_26, %c113] : memref<16x512xf32, #tpu.memory_space<vmem>>, vector<16x256xf32>
    %37 = vector.broadcast %17 : vector<1x256xf32> to vector<16x256xf32>
    %38 = arith.mulf %36, %37 : vector<16x256xf32>
    %c2 = arith.constant 2 : index
    %c0_27 = arith.constant 0 : index
    %c0_28 = arith.constant 0 : index
    %39 = vector.load %arg4[%c2, %c0_27, %c0_28] : memref<9x16x16xbf16, #tpu.memory_space<vmem>>, vector<1x16x16xbf16>
    %40 = vector.shape_cast %39 : vector<1x16x16xbf16> to vector<16x16xbf16>
    %41 = arith.truncf %38 : vector<16x256xf32> to vector<16x256xbf16>
    %cst_29 = arith.constant dense<0.000000e+00> : vector<16x256xf32>
    %42 = tpu.matmul %40, %41, %cst_29 {dimension_numbers = #tpu.dot_dimension_numbers<[1], [0], [0], [1], [0, 0, 1, 1], [], []>} : vector<16x16xbf16>, vector<16x256xbf16>, vector<16x256xf32> -> vector<16x256xf32>
    %43 = arith.addf %35, %42 : vector<16x256xf32>
    %c0_30 = arith.constant 0 : index
    %c127 = arith.constant 127 : index
    %44 = vector.load %arg10[%c0_30, %c127] : memref<16x512xf32, #tpu.memory_space<vmem>>, vector<16x256xf32>
    %45 = vector.broadcast %16 : vector<1x256xf32> to vector<16x256xf32>
    %46 = arith.mulf %44, %45 : vector<16x256xf32>
    %c3 = arith.constant 3 : index
    %c0_31 = arith.constant 0 : index
    %c0_32 = arith.constant 0 : index
    %47 = vector.load %arg4[%c3, %c0_31, %c0_32] : memref<9x16x16xbf16, #tpu.memory_space<vmem>>, vector<1x16x16xbf16>
    %48 = vector.shape_cast %47 : vector<1x16x16xbf16> to vector<16x16xbf16>
    %49 = arith.truncf %46 : vector<16x256xf32> to vector<16x256xbf16>
    %cst_33 = arith.constant dense<0.000000e+00> : vector<16x256xf32>
    %50 = tpu.matmul %48, %49, %cst_33 {dimension_numbers = #tpu.dot_dimension_numbers<[1], [0], [0], [1], [0, 0, 1, 1], [], []>} : vector<16x16xbf16>, vector<16x256xbf16>, vector<16x256xf32> -> vector<16x256xf32>
    %51 = arith.addf %43, %50 : vector<16x256xf32>
    %c0_34 = arith.constant 0 : index
    %c128_35 = arith.constant 128 : index
    %52 = vector.load %arg10[%c0_34, %c128_35] : memref<16x512xf32, #tpu.memory_space<vmem>>, vector<16x256xf32>
    %c4 = arith.constant 4 : index
    %c0_36 = arith.constant 0 : index
    %c0_37 = arith.constant 0 : index
    %53 = vector.load %arg4[%c4, %c0_36, %c0_37] : memref<9x16x16xbf16, #tpu.memory_space<vmem>>, vector<1x16x16xbf16>
    %54 = vector.shape_cast %53 : vector<1x16x16xbf16> to vector<16x16xbf16>
    %55 = arith.truncf %52 : vector<16x256xf32> to vector<16x256xbf16>
    %cst_38 = arith.constant dense<0.000000e+00> : vector<16x256xf32>
    %56 = tpu.matmul %54, %55, %cst_38 {dimension_numbers = #tpu.dot_dimension_numbers<[1], [0], [0], [1], [0, 0, 1, 1], [], []>} : vector<16x16xbf16>, vector<16x256xbf16>, vector<16x256xf32> -> vector<16x256xf32>
    %57 = arith.addf %51, %56 : vector<16x256xf32>
    %c0_39 = arith.constant 0 : index
    %c129 = arith.constant 129 : index
    %58 = vector.load %arg10[%c0_39, %c129] : memref<16x512xf32, #tpu.memory_space<vmem>>, vector<16x256xf32>
    %59 = vector.broadcast %17 : vector<1x256xf32> to vector<16x256xf32>
    %60 = arith.mulf %58, %59 : vector<16x256xf32>
    %c5 = arith.constant 5 : index
    %c0_40 = arith.constant 0 : index
    %c0_41 = arith.constant 0 : index
    %61 = vector.load %arg4[%c5, %c0_40, %c0_41] : memref<9x16x16xbf16, #tpu.memory_space<vmem>>, vector<1x16x16xbf16>
    %62 = vector.shape_cast %61 : vector<1x16x16xbf16> to vector<16x16xbf16>
    %63 = arith.truncf %60 : vector<16x256xf32> to vector<16x256xbf16>
    %cst_42 = arith.constant dense<0.000000e+00> : vector<16x256xf32>
    %64 = tpu.matmul %62, %63, %cst_42 {dimension_numbers = #tpu.dot_dimension_numbers<[1], [0], [0], [1], [0, 0, 1, 1], [], []>} : vector<16x16xbf16>, vector<16x256xbf16>, vector<16x256xf32> -> vector<16x256xf32>
    %65 = arith.addf %57, %64 : vector<16x256xf32>
    %c0_43 = arith.constant 0 : index
    %c143 = arith.constant 143 : index
    %66 = vector.load %arg10[%c0_43, %c143] : memref<16x512xf32, #tpu.memory_space<vmem>>, vector<16x256xf32>
    %67 = vector.broadcast %16 : vector<1x256xf32> to vector<16x256xf32>
    %68 = arith.mulf %66, %67 : vector<16x256xf32>
    %c6 = arith.constant 6 : index
    %c0_44 = arith.constant 0 : index
    %c0_45 = arith.constant 0 : index
    %69 = vector.load %arg4[%c6, %c0_44, %c0_45] : memref<9x16x16xbf16, #tpu.memory_space<vmem>>, vector<1x16x16xbf16>
    %70 = vector.shape_cast %69 : vector<1x16x16xbf16> to vector<16x16xbf16>
    %71 = arith.truncf %68 : vector<16x256xf32> to vector<16x256xbf16>
    %cst_46 = arith.constant dense<0.000000e+00> : vector<16x256xf32>
    %72 = tpu.matmul %70, %71, %cst_46 {dimension_numbers = #tpu.dot_dimension_numbers<[1], [0], [0], [1], [0, 0, 1, 1], [], []>} : vector<16x16xbf16>, vector<16x256xbf16>, vector<16x256xf32> -> vector<16x256xf32>
    %73 = arith.addf %65, %72 : vector<16x256xf32>
    %c0_47 = arith.constant 0 : index
    %c144 = arith.constant 144 : index
    %74 = vector.load %arg10[%c0_47, %c144] : memref<16x512xf32, #tpu.memory_space<vmem>>, vector<16x256xf32>
    %c7 = arith.constant 7 : index
    %c0_48 = arith.constant 0 : index
    %c0_49 = arith.constant 0 : index
    %75 = vector.load %arg4[%c7, %c0_48, %c0_49] : memref<9x16x16xbf16, #tpu.memory_space<vmem>>, vector<1x16x16xbf16>
    %76 = vector.shape_cast %75 : vector<1x16x16xbf16> to vector<16x16xbf16>
    %77 = arith.truncf %74 : vector<16x256xf32> to vector<16x256xbf16>
    %cst_50 = arith.constant dense<0.000000e+00> : vector<16x256xf32>
    %78 = tpu.matmul %76, %77, %cst_50 {dimension_numbers = #tpu.dot_dimension_numbers<[1], [0], [0], [1], [0, 0, 1, 1], [], []>} : vector<16x16xbf16>, vector<16x256xbf16>, vector<16x256xf32> -> vector<16x256xf32>
    %79 = arith.addf %73, %78 : vector<16x256xf32>
    %c0_51 = arith.constant 0 : index
    %c145 = arith.constant 145 : index
    %80 = vector.load %arg10[%c0_51, %c145] : memref<16x512xf32, #tpu.memory_space<vmem>>, vector<16x256xf32>
    %81 = vector.broadcast %17 : vector<1x256xf32> to vector<16x256xf32>
    %82 = arith.mulf %80, %81 : vector<16x256xf32>
    %c8 = arith.constant 8 : index
    %c0_52 = arith.constant 0 : index
    %c0_53 = arith.constant 0 : index
    %83 = vector.load %arg4[%c8, %c0_52, %c0_53] : memref<9x16x16xbf16, #tpu.memory_space<vmem>>, vector<1x16x16xbf16>
    %84 = vector.shape_cast %83 : vector<1x16x16xbf16> to vector<16x16xbf16>
    %85 = arith.truncf %82 : vector<16x256xf32> to vector<16x256xbf16>
    %cst_54 = arith.constant dense<0.000000e+00> : vector<16x256xf32>
    %86 = tpu.matmul %84, %85, %cst_54 {dimension_numbers = #tpu.dot_dimension_numbers<[1], [0], [0], [1], [0, 0, 1, 1], [], []>} : vector<16x16xbf16>, vector<16x256xbf16>, vector<16x256xf32> -> vector<16x256xf32>
    %87 = arith.addf %79, %86 : vector<16x256xf32>
    %cst_55 = arith.constant 0.000000e+00 : f32
    %cst_56 = arith.constant 6.000000e+00 : f32
    %88 = vector.broadcast %cst_55 : f32 to vector<16x256xf32>
    %89 = arith.maximumf %88, %87 : vector<16x256xf32>
    %90 = vector.broadcast %cst_56 : f32 to vector<16x256xf32>
    %91 = arith.minimumf %90, %89 : vector<16x256xf32>
    %c0_57 = arith.constant 0 : index
    %c0_58 = arith.constant 0 : index
    %92 = vector.load %arg6[%c0_57, %c0_58] : memref<32x16xbf16, #tpu.memory_space<vmem>>, vector<32x16xbf16>
    %93 = arith.truncf %91 : vector<16x256xf32> to vector<16x256xbf16>
    %cst_59 = arith.constant dense<0.000000e+00> : vector<32x256xf32>
    %94 = tpu.matmul %92, %93, %cst_59 {dimension_numbers = #tpu.dot_dimension_numbers<[1], [0], [0], [1], [0, 0, 1, 1], [], []>} : vector<32x16xbf16>, vector<16x256xbf16>, vector<32x256xf32> -> vector<32x256xf32>
    %c0_60 = arith.constant 0 : index
    %c0_61 = arith.constant 0 : index
    %95 = vector.load %arg7[%c0_60, %c0_61] : memref<32x1xf32, #tpu.memory_space<vmem>>, vector<32x1xf32>
    %96 = vector.broadcast %95 : vector<32x1xf32> to vector<32x256xf32>
    %97 = arith.addf %94, %96 : vector<32x256xf32>
    %98 = arith.addf %97, %1 : vector<32x256xf32>
    %cst_62 = arith.constant 0.000000e+00 : f32
    %cst_63 = arith.constant 6.000000e+00 : f32
    %99 = vector.broadcast %cst_62 : f32 to vector<32x256xf32>
    %100 = arith.maximumf %99, %98 : vector<32x256xf32>
    %101 = vector.broadcast %cst_63 : f32 to vector<32x256xf32>
    %102 = arith.minimumf %101, %100 : vector<32x256xf32>
    %c0_64 = arith.constant 0 : index
    %c0_65 = arith.constant 0 : index
    %c0_66 = arith.constant 0 : index
    %103 = vector.load %arg9[%c0_64, %c0_65, %c0_66] : memref<1x32x256xf32, #tpu.memory_space<vmem>>, vector<1x32x256xf32>
    %104 = vector.shape_cast %103 : vector<1x32x256xf32> to vector<32x256xf32>
    %105 = vector.shape_cast %102 : vector<32x256xf32> to vector<1x32x256xf32>
    tpu.vector_store %arg9[%c0_64, %c0_65, %c0_66], %105 {strides = array<i32>} : memref<1x32x256xf32, #tpu.memory_space<vmem>>, vector<1x32x256xf32>,
    return
  }
  func.func @transform_0(%arg0: i32) -> (i32, i32, i32) {
    %c0_i32 = arith.constant 0 : i32
    %c0_i32_0 = arith.constant 0 : i32
    %c0_i32_1 = arith.constant 0 : i32
    return %arg0, %c0_i32, %c0_i32_0 : i32, i32, i32
  }
  func.func @transform_1(%arg0: i32) -> (i32, i32) {
    %c0_i32 = arith.constant 0 : i32
    %c0_i32_0 = arith.constant 0 : i32
    %c0_i32_1 = arith.constant 0 : i32
    return %c0_i32, %c0_i32_0 : i32, i32
  }
  func.func @transform_2(%arg0: i32) -> (i32, i32) {
    %c0_i32 = arith.constant 0 : i32
    %c0_i32_0 = arith.constant 0 : i32
    %c0_i32_1 = arith.constant 0 : i32
    return %c0_i32, %c0_i32_0 : i32, i32
  }
  func.func @transform_3(%arg0: i32) -> (i32, i32, i32) {
    %c0_i32 = arith.constant 0 : i32
    %c0_i32_0 = arith.constant 0 : i32
    %c0_i32_1 = arith.constant 0 : i32
    %c0_i32_2 = arith.constant 0 : i32
    return %c0_i32, %c0_i32_0, %c0_i32_1 : i32, i32, i32
  }
  func.func @transform_4(%arg0: i32) -> (i32, i32) {
    %c0_i32 = arith.constant 0 : i32
    %c0_i32_0 = arith.constant 0 : i32
    %c0_i32_1 = arith.constant 0 : i32
    return %c0_i32, %c0_i32_0 : i32, i32
  }
  func.func @transform_5(%arg0: i32) -> (i32, i32) {
    %c0_i32 = arith.constant 0 : i32
    %c0_i32_0 = arith.constant 0 : i32
    %c0_i32_1 = arith.constant 0 : i32
    return %c0_i32, %c0_i32_0 : i32, i32
  }
  func.func @transform_6(%arg0: i32) -> (i32, i32) {
    %c0_i32 = arith.constant 0 : i32
    %c0_i32_0 = arith.constant 0 : i32
    %c0_i32_1 = arith.constant 0 : i32
    return %c0_i32, %c0_i32_0 : i32, i32
  }
  func.func @transform_7(%arg0: i32) -> (i32, i32) {
    %c0_i32 = arith.constant 0 : i32
    %c0_i32_0 = arith.constant 0 : i32
    %c0_i32_1 = arith.constant 0 : i32
    return %c0_i32, %c0_i32_0 : i32, i32
  }
  func.func @transform_8(%arg0: i32) -> (i32, i32, i32) {
    %c0_i32 = arith.constant 0 : i32
    %c0_i32_0 = arith.constant 0 : i32
    %c0_i32_1 = arith.constant 0 : i32
    return %arg0, %c0_i32, %c0_i32_0 : i32, i32, i32
  }
}

</mosaic_0001>

<llo_original>
// kernel: shufflenet_unit.1
$region0: #{shufflenet_unit.1}
  #allocation0 [shape = 'u32[]', space=smem, size = 0x4, offset = 0x4, fixed_abs, tag = 'smem constant byte address 0x4 - core index']
  #allocation1 [shape = 'u32[72,128]{1,0:T(1,128)}', space=vmem, size = 0x9000, scoped, tag = 'internal scratch']
  #allocation2 [shape = 'f32[16,512]{1,0:T(8,128)}', space=vmem, size = 0x8000, scoped, tag = 'scratch operand']
  %s0 = inlined_call_operand.vmem [shape: f32[2,32,256], index: 0, kind: input, shape index: {}]
  %s1 = inlined_call_operand.vmem [shape: bf16[16,32], index: 1, kind: input, shape index: {}]
  %s2 = inlined_call_operand.vmem [shape: f32[16,1], index: 2, kind: input, shape index: {}]
  %s3 = inlined_call_operand.vmem [shape: bf16[9,16,16], index: 3, kind: input, shape index: {}]
  %s4 = inlined_call_operand.vmem [shape: f32[16,1], index: 4, kind: input, shape index: {}]
  %s5 = inlined_call_operand.vmem [shape: bf16[32,16], index: 5, kind: input, shape index: {}]
  %s6 = inlined_call_operand.vmem [shape: f32[32,1], index: 6, kind: input, shape index: {}]
  %s7 = inlined_call_operand.vmem [shape: f32[2,256], index: 7, kind: input, shape index: {}]
  %s8 = inlined_call_operand.vmem [shape: f32[2,32,256], index: 8, kind: output, shape index: {}]
  %s9 = sld [smem:[#allocation0]]
  $region65: #{shufflenet_unit.1} parent=0
    _
  %s11 = ssub.s32 1, %s9
  %s12 = scalar_select 0, %s11, %s9
  loop: start=0, step=1, limit=4
  $region2: #{shufflenet_unit.1} parent=0 // loop_pre_header
    _
  $region3: #{shufflenet_unit.1} parent=0 // loop_header
    %s14 = sphi 0, %s18
    %p15 = scmp.ge.s32.totalorder %s14, 4
    %s24 = sphi 0, %s26
    %s27 = sphi 0, %s24
    %s28 = sphi 0, %s27
    %s44 = sphi 0, %s28
    %s48 = sphi 0, %s48
    %s50 = sphi 0, %s48
    %s51 = sphi 0, %s50
    %s65 = sphi 0, %s51
    %s69 = sphi 0, %s69
    %s71 = sphi 0, %s69
    %s72 = sphi 0, %s71
    %s86 = sphi 0, %s72
    %s90 = sphi 0, %s90
    %s92 = sphi 0, %s90
    %s93 = sphi 0, %s92
    %s107 = sphi 0, %s93
    %s111 = sphi 0, %s111
    %s113 = sphi 0, %s111
    %s114 = sphi 0, %s113
    %s128 = sphi 0, %s114
    %s132 = sphi 0, %s132
    %s134 = sphi 0, %s132
    %s135 = sphi 0, %s134
    %s149 = sphi 0, %s135
    %s153 = sphi 0, %s153
    %s155 = sphi 0, %s153
    %s156 = sphi 0, %s155
    %s170 = sphi 0, %s156
    %s174 = sphi 0, %s174
    %s176 = sphi 0, %s174
    %s177 = sphi 0, %s176
    %s191 = sphi 0, %s177
    %s197 = sphi 0, %s199
    %s200 = sphi 0, %s197
    %s201 = sphi 0, %s200
    %s217 = sphi 0, %s201
  $region4: #{shufflenet_unit.1} parent=0 // loop_header_branch
    %17 = sbr.rel (%p15) target = $region8
  $region5: #{shufflenet_unit.1} parent=0 // loop_body
    %s19 = ssub.s32 %s14, 1
    %s20 = ssub.s32 %s14, 2
    %s21 = sadd.s32 %s14, 1
    %s22 = ssub.s32 %s14, %s21
    %p23 = scmp.eq.s32.totalorder %s22, 0
    %s25 = sadd.s32 %s24, 1
    %s26 = scalar_select %p23, %s24, %s25
    %p29 = pneg %p23
    %p30 = scmp.eq.s32.totalorder %s14, 1
    %p31 = por %p29, %p30
    %p32 = scmp.ne.s32.totalorder %s24, %s27
    %p33 = scmp.eq.s32.totalorder %s14, 0
    %p34 = por %p32, %p33
    %p35 = scmp.ne.s32.totalorder %s24, %s27
    %p36 = scmp.eq.s32.totalorder %s19, 1
    %p37 = por %p35, %p36
    %p38 = scmp.ne.s32.totalorder %s27, %s28
    %p39 = scmp.eq.s32.totalorder %s19, 0
    %p40 = por %p38, %p39
    %p41 = scmp.ne.s32.totalorder %s27, %s28
    %p42 = scmp.eq.s32.totalorder %s20, 1
    %p43 = por %p41, %p42
    %p45 = scmp.ne.s32.totalorder %s28, %s44
    %p46 = scmp.eq.s32.totalorder %s20, 0
    %p47 = por %p45, %p46
    %s49 = sadd.s32 %s48, 1
    %p52 = scmp.eq.s32.totalorder %s14, 1
    %p53 = scmp.ne.s32.totalorder %s48, %s50
    %p54 = scmp.eq.s32.totalorder %s14, 0
    %p55 = por %p53, %p54
    %p56 = scmp.ne.s32.totalorder %s48, %s50
    %p57 = scmp.eq.s32.totalorder %s19, 1
    %p58 = por %p56, %p57
    %p59 = scmp.ne.s32.totalorder %s50, %s51
    %p60 = scmp.eq.s32.totalorder %s19, 0
    %p61 = por %p59, %p60
    %p62 = scmp.ne.s32.totalorder %s50, %s51
    %p63 = scmp.eq.s32.totalorder %s20, 1
    %p64 = por %p62, %p63
    %p66 = scmp.ne.s32.totalorder %s51, %s65
    %p67 = scmp.eq.s32.totalorder %s20, 0
    %p68 = por %p66, %p67
    %s70 = sadd.s32 %s69, 1
    %p73 = scmp.eq.s32.totalorder %s14, 1
    %p74 = scmp.ne.s32.totalorder %s69, %s71
    %p75 = scmp.eq.s32.totalorder %s14, 0
    %p76 = por %p74, %p75
    %p77 = scmp.ne.s32.totalorder %s69, %s71
    %p78 = scmp.eq.s32.totalorder %s19, 1
    %p79 = por %p77, %p78
    %p80 = scmp.ne.s32.totalorder %s71, %s72
    %p81 = scmp.eq.s32.totalorder %s19, 0
    %p82 = por %p80, %p81
    %p83 = scmp.ne.s32.totalorder %s71, %s72
    %p84 = scmp.eq.s32.totalorder %s20, 1
    %p85 = por %p83, %p84
    %p87 = scmp.ne.s32.totalorder %s72, %s86
    %p88 = scmp.eq.s32.totalorder %s20, 0
    %p89 = por %p87, %p88
    %s91 = sadd.s32 %s90, 1
    %p94 = scmp.eq.s32.totalorder %s14, 1
    %p95 = scmp.ne.s32.totalorder %s90, %s92
    %p96 = scmp.eq.s32.totalorder %s14, 0
    %p97 = por %p95, %p96
    %p98 = scmp.ne.s32.totalorder %s90, %s92
    %p99 = scmp.eq.s32.totalorder %s19, 1
    %p100 = por %p98, %p99
    %p101 = scmp.ne.s32.totalorder %s92, %s93
    %p102 = scmp.eq.s32.totalorder %s19, 0
    %p103 = por %p101, %p102
    %p104 = scmp.ne.s32.totalorder %s92, %s93
    %p105 = scmp.eq.s32.totalorder %s20, 1
    %p106 = por %p104, %p105
    %p108 = scmp.ne.s32.totalorder %s93, %s107
    %p109 = scmp.eq.s32.totalorder %s20, 0
    %p110 = por %p108, %p109
    %s112 = sadd.s32 %s111, 1
    %p115 = scmp.eq.s32.totalorder %s14, 1
    %p116 = scmp.ne.s32.totalorder %s111, %s113
    %p117 = scmp.eq.s32.totalorder %s14, 0
    %p118 = por %p116, %p117
    %p119 = scmp.ne.s32.totalorder %s111, %s113
    %p120 = scmp.eq.s32.totalorder %s19, 1
    %p121 = por %p119, %p120
    %p122 = scmp.ne.s32.totalorder %s113, %s114
    %p123 = scmp.eq.s32.totalorder %s19, 0
    %p124 = por %p122, %p123
    %p125 = scmp.ne.s32.totalorder %s113, %s114
    %p126 = scmp.eq.s32.totalorder %s20, 1
    %p127 = por %p125, %p126
    %p129 = scmp.ne.s32.totalorder %s114, %s128
    %p130 = scmp.eq.s32.totalorder %s20, 0
    %p131 = por %p129, %p130
    %s133 = sadd.s32 %s132, 1
    %p136 = scmp.eq.s32.totalorder %s14, 1
    %p137 = scmp.ne.s32.totalorder %s132, %s134
    %p138 = scmp.eq.s32.totalorder %s14, 0
    %p139 = por %p137, %p138
    %p140 = scmp.ne.s32.totalorder %s132, %s134
    %p141 = scmp.eq.s32.totalorder %s19, 1
    %p142 = por %p140, %p141
    %p143 = scmp.ne.s32.totalorder %s134, %s135
    %p144 = scmp.eq.s32.totalorder %s19, 0
    %p145 = por %p143, %p144
    %p146 = scmp.ne.s32.totalorder %s134, %s135
    %p147 = scmp.eq.s32.totalorder %s20, 1
    %p148 = por %p146, %p147
    %p150 = scmp.ne.s32.totalorder %s135, %s149
    %p151 = scmp.eq.s32.totalorder %s20, 0
    %p152 = por %p150, %p151
    %s154 = sadd.s32 %s153, 1
    %p157 = scmp.eq.s32.totalorder %s14, 1
    %p158 = scmp.ne.s32.totalorder %s153, %s155
    %p159 = scmp.eq.s32.totalorder %s14, 0
    %p160 = por %p158, %p159
    %p161 = scmp.ne.s32.totalorder %s153, %s155
    %p162 = scmp.eq.s32.totalorder %s19, 1
    %p163 = por %p161, %p162
    %p164 = scmp.ne.s32.totalorder %s155, %s156
    %p165 = scmp.eq.s32.totalorder %s19, 0
    %p166 = por %p164, %p165
    %p167 = scmp.ne.s32.totalorder %s155, %s156
    %p168 = scmp.eq.s32.totalorder %s20, 1
    %p169 = por %p167, %p168
    %p171 = scmp.ne.s32.totalorder %s156, %s170
    %p172 = scmp.eq.s32.totalorder %s20, 0
    %p173 = por %p171, %p172
    %s175 = sadd.s32 %s174, 1
    %p178 = scmp.eq.s32.totalorder %s14, 1
    %p179 = scmp.ne.s32.totalorder %s174, %s176
    %p180 = scmp.eq.s32.totalorder %s14, 0
    %p181 = por %p179, %p180
    %p182 = scmp.ne.s32.totalorder %s174, %s176
    %p183 = scmp.eq.s32.totalorder %s19, 1
    %p184 = por %p182, %p183
    %p185 = scmp.ne.s32.totalorder %s176, %s177
    %p186 = scmp.eq.s32.totalorder %s19, 0
    %p187 = por %p185, %p186
    %p188 = scmp.ne.s32.totalorder %s176, %s177
    %p189 = scmp.eq.s32.totalorder %s20, 1
    %p190 = por %p188, %p189
    %p192 = scmp.ne.s32.totalorder %s177, %s191
    %p193 = scmp.eq.s32.totalorder %s20, 0
    %p194 = por %p192, %p193
    %s195 = ssub.s32 %s14, %s21
    %p196 = scmp.eq.s32.totalorder %s195, 0
    %s198 = sadd.s32 %s197, 1
    %s199 = scalar_select %p196, %s197, %s198
    %p202 = pneg %p196
    %p203 = scmp.eq.s32.totalorder %s14, 1
    %p204 = por %p202, %p203
    %p205 = scmp.ne.s32.totalorder %s197, %s200
    %p206 = scmp.eq.s32.totalorder %s14, 0
    %p207 = por %p205, %p206
    %p208 = scmp.ne.s32.totalorder %s197, %s200
    %p209 = scmp.eq.s32.totalorder %s19, 1
    %p210 = por %p208, %p209
    %p211 = scmp.ne.s32.totalorder %s200, %s201
    %p212 = scmp.eq.s32.totalorder %s19, 0
    %p213 = por %p211, %p212
    %p214 = scmp.ne.s32.totalorder %s200, %s201
    %p215 = scmp.eq.s32.totalorder %s20, 1
    %p216 = por %p214, %p215
    %p218 = scmp.ne.s32.totalorder %s201, %s217
    %p219 = scmp.eq.s32.totalorder %s20, 0
    %p220 = por %p218, %p219
    %p221 = scmp.le.s32.totalorder 1, %s14
    %p222 = scmp.lt.s32.totalorder %s14, 3
    %p223 = pnand %p221, %p222
    %p224 = pneg %p223
    // Predicated region
    $region9: #{shufflenet_unit.1} parent=5 // pred_check
      _
    $region10: #{shufflenet_unit.1} parent=5 // pred_check_branch
      %226 = sbr.rel (%p223) target = $region12
    $region11: #{shufflenet_unit.1} parent=5 // pred_region
      %s227 = ssub.s32 %s14, 1
      // Predicated region
      $region13: #{shufflenet_unit.1} parent=11 // pred_check
        %p228 = pneg %p61
      $region14: #{shufflenet_unit.1} parent=11 // pred_check_branch
        %230 = sbr.rel (%p228) target = $region16
      $region15: #{shufflenet_unit.1} parent=11 // pred_region
        _
      $region16: #{shufflenet_unit.1} parent=11 // pred_fallthru
        _
      // Predicated region
      $region17: #{shufflenet_unit.1} parent=11 // pred_check
        %p231 = pneg %p82
      $region18: #{shufflenet_unit.1} parent=11 // pred_check_branch
        %233 = sbr.rel (%p231) target = $region20
      $region19: #{shufflenet_unit.1} parent=11 // pred_region
        _
      $region20: #{shufflenet_unit.1} parent=11 // pred_fallthru
        _
      // Predicated region
      $region21: #{shufflenet_unit.1} parent=11 // pred_check
        %p234 = pneg %p103
      $region22: #{shufflenet_unit.1} parent=11 // pred_check_branch
        %236 = sbr.rel (%p234) target = $region24
      $region23: #{shufflenet_unit.1} parent=11 // pred_region
        _
      $region24: #{shufflenet_unit.1} parent=11 // pred_fallthru
        _
      // Predicated region
      $region25: #{shufflenet_unit.1} parent=11 // pred_check
        %p237 = pneg %p124
      $region26: #{shufflenet_unit.1} parent=11 // pred_check_branch
        %239 = sbr.rel (%p237) target = $region28
      $region27: #{shufflenet_unit.1} parent=11 // pred_region
        _
      $region28: #{shufflenet_unit.1} parent=11 // pred_fallthru
        _
      // Predicated region
      $region29: #{shufflenet_unit.1} parent=11 // pred_check
        %p240 = pneg %p145
      $region30: #{shufflenet_unit.1} parent=11 // pred_check_branch
        %242 = sbr.rel (%p240) target = $region32
      $region31: #{shufflenet_unit.1} parent=11 // pred_region
        _
      $region32: #{shufflenet_unit.1} parent=11 // pred_fallthru
        _
      // Predicated region
      $region33: #{shufflenet_unit.1} parent=11 // pred_check
        %p243 = pneg %p166
      $region34: #{shufflenet_unit.1} parent=11 // pred_check_branch
        %245 = sbr.rel (%p243) target = $region36
      $region35: #{shufflenet_unit.1} parent=11 // pred_region
        _
      $region36: #{shufflenet_unit.1} parent=11 // pred_fallthru
        _
      // Predicated region
      $region37: #{shufflenet_unit.1} parent=11 // pred_check
        %p246 = pneg %p187
      $region38: #{shufflenet_unit.1} parent=11 // pred_check_branch
        %248 = sbr.rel (%p246) target = $region40
      $region39: #{shufflenet_unit.1} parent=11 // pred_region
        _
      $region40: #{shufflenet_unit.1} parent=11 // pred_fallthru
        _
    $region12: #{shufflenet_unit.1} parent=5 // pred_fallthru
      _
    %p249 = scmp.lt.s32.totalorder %s14, 2
    // Predicated region
    $region41: #{shufflenet_unit.1} parent=5 // pred_check
      %p250 = pneg %p249
    $region42: #{shufflenet_unit.1} parent=5 // pred_check_branch
      %252 = sbr.rel (%p250) target = $region44
    $region43: #{shufflenet_unit.1} parent=5 // pred_region
      // Predicated region
      $region45: #{shufflenet_unit.1} parent=43 // pred_check
        %p253 = pneg %p34
      $region46: #{shufflenet_unit.1} parent=43 // pred_check_branch
        %255 = sbr.rel (%p253) target = $region48
      $region47: #{shufflenet_unit.1} parent=43 // pred_region
        %p256 = scmp.lt.s32.totalorder %s14, 1
        %s257 = scalar_select %p256, %s14, 1
        %s258 = smul.addr %s257, 8
        %s259 = smul.addr %s258, 8
        %s260 = scalar_lea.vmem %s0, %s259
      $region48: #{shufflenet_unit.1} parent=43 // pred_fallthru
        _
    $region44: #{shufflenet_unit.1} parent=5 // pred_fallthru
      _
    %p261 = scmp.le.s32.totalorder 1, %s14
    %p262 = scmp.lt.s32.totalorder %s14, 3
    %p263 = pnand %p261, %p262
    %p264 = pneg %p263
    // Predicated region
    $region49: #{shufflenet_unit.1} parent=5 // pred_check
      _
    $region50: #{shufflenet_unit.1} parent=5 // pred_check_branch
      %266 = sbr.rel (%p263) target = $region52
    $region51: #{shufflenet_unit.1} parent=5 // pred_region
      %s267 = ssub.s32 %s14, 1
      %p268 = scmp.lt.s32.totalorder %s19, 1
      %s269 = scalar_select %p268, %s19, 1
      %s270 = smul.addr %s269, 8
      %s271 = smul.addr %s270, 8
      %s272 = scalar_lea.vmem %s0, %s271
      %p273 = pneg %p40
      %p274 = pneg %p37
      %p275 = pneg %p61
      %p276 = pneg %p58
      %p277 = pneg %p82
      %p278 = pneg %p79
      %p279 = pneg %p103
      %p280 = pneg %p100
      %p281 = pneg %p124
      %p282 = pneg %p121
      %p283 = pneg %p145
      %p284 = pneg %p142
      %p285 = pneg %p166
      %p286 = pneg %p163
      %p287 = pneg %p187
      %p288 = pneg %p184
      %p289 = pneg %p213
      %p290 = pneg %p210
      %p291 = scmp.lt.s32.totalorder %s19, 1
      %s292 = scalar_select %p291, %s19, 1
      %s293 = smul.addr %s292, 8
      %s294 = smul.addr %s293, 8
      %s295 = scalar_lea.vmem %s8, %s294
      %p296 = scmp.lt.s32.totalorder %s19, 1
      %s297 = scalar_select %p296, %s19, 1
      %s298 = smul.addr %s297, 8
      %s299 = smul.addr %s298, 8
      %s300 = scalar_lea.vmem %s0, %s299
      %p301 = scmp.lt.s32.totalorder %s19, 1
      %s302 = scalar_select %p301, %s19, 1
      %s303 = smul.addr %s302, 8
      %s304 = smul.addr %s303, 8
      %s305 = scalar_lea.vmem %s8, %s304
      %v307 = vld [vmem:[%s300] sm:$0xff]
      %v308 = vld [vmem:[%s300 + $0x8] sm:$0xff]
      %v309 = vld [vmem:[%s300 + $0x10] sm:$0xff]
      %v310 = vld [vmem:[%s300 + $0x18] sm:$0xff]
      %v311 = vld [vmem:[%s300 + $0x20] sm:$0xff]
      %v312 = vld [vmem:[%s300 + $0x28] sm:$0xff]
      %v313 = vld [vmem:[%s300 + $0x30] sm:$0xff]
      %v314 = vld [vmem:[%s300 + $0x38] sm:$0xff]
      %v315 = vld [vmem:[%s7] sm:$0xf]
      %v316 = vld [vmem:[%s1] sm:$0xf]
      %v317 = vld [vmem:[%s1 + $0x4] sm:$0xf]
      %v318 = vpack.c.bf16 %v309, %v307
      %v319 = vpack.c.bf16 %v310, %v308
      %v320 = vpack.c.bf16 %v313, %v311
      %v321 = vpack.c.bf16 %v314, %v312
      %v322 = vld [vmem:[%s2] sm:$0xff]
      %v323 = vld [vmem:[%s2 + $0x8] sm:$0xff]
      %325 = vset.pattern.permute.xlu0 0
      %326 = vperm.xlu0 %325, %v322
      %v327 = vpop.permute.xlu0 %326
      %330 = vset.pattern.permute.xlu0 0
      %331 = vperm.xlu0 %330, %v323
      %v332 = vpop.permute.xlu0 %331
      %v336 = vunpack.c.l.b16 %v316
      %v337 = vunpack.c.l.b16 %v317
      %v338 = vpack.c.b16 %v337, %v336
      %vm339 = vcmask 261120
      %v341 = vsel %vm339, %v338, 0
      %343 = vmatpush.bf16.msra.mxu0 0
      %344 = vmatpush.bf16.msra.mxu0 0
      %345 = vmatpush.bf16.msra.mxu0 0
      %346 = vmatpush.bf16.msra.mxu0 0
      %347 = vmatpush.bf16.msra.mxu0 0
      %348 = vmatpush.bf16.msra.mxu0 0
      %349 = vmatpush.bf16.msra.mxu0 %v320
      %350 = vmatpush.bf16.msra.mxu0 %v318
      %351 = vmatmul.bf16.gmra.mxu0 %v341
      %v352 = vpop.f32.mrf.mxu0
      %v353 = vadd.f32 %v327, %v352
      %v354 = vpop.f32.mrf.mxu0
      %v355 = vadd.f32 %v332, %v354
      %356 = vdwg.mxu0
      %357 = vmatpush.bf16.msra.mxu0 0
      %358 = vmatpush.bf16.msra.mxu0 0
      %359 = vmatpush.bf16.msra.mxu0 0
      %360 = vmatpush.bf16.msra.mxu0 0
      %361 = vmatpush.bf16.msra.mxu0 0
      %362 = vmatpush.bf16.msra.mxu0 0
      %363 = vmatpush.bf16.msra.mxu0 %v321
      %364 = vmatpush.bf16.msra.mxu0 %v319
      %365 = vmatmul.bf16.gmra.mxu0 %v341
      %v366 = vpop.f32.mrf.mxu0
      %v367 = vadd.f32 %v327, %v366
      %v368 = vpop.f32.mrf.mxu0
      %v369 = vadd.f32 %v332, %v368
      %370 = vdwg.mxu0
      %v371 = vmax.f32 %v353, 0.0
      %v372 = vmax.f32 %v367, 0.0
      %v373 = vmax.f32 %v355, 0.0
      %v374 = vmax.f32 %v369, 0.0
      %v375 = vmin.f32 %v371, 6.0
      %v376 = vmin.f32 %v372, 6.0
      %v377 = vmin.f32 %v373, 6.0
      %v378 = vmin.f32 %v374, 6.0
      %379 = vst [vmem:[#allocation2] sm:$0xff] 0.0
      %380 = vst [vmem:[#allocation2 + $0x8] sm:$0xff] 0.0
      %381 = vst [vmem:[#allocation2 + $0x10] sm:$0xff] 0.0
      %382 = vst [vmem:[#allocation2 + $0x18] sm:$0xff] 0.0
      %383 = vst [vmem:[#allocation2 + $0x20] sm:$0xff] 0.0
      %384 = vst [vmem:[#allocation2 + $0x28] sm:$0xff] 0.0
      %385 = vst [vmem:[#allocation2 + $0x30] sm:$0xff] 0.0
      %386 = vst [vmem:[#allocation2 + $0x38] sm:$0xff] 0.0
      %387 = vst [vmem:[#allocation2 + $0x8] sm:$0xff] %v375
      %388 = vst [vmem:[#allocation2 + $0x10] sm:$0xff] %v376
      %389 = vst [vmem:[#allocation2 + $0x28] sm:$0xff] %v377
      %390 = vst [vmem:[#allocation2 + $0x30] sm:$0xff] %v378
      %v391 = vld [vmem:[%s4] sm:$0xff]
      %v392 = vld [vmem:[%s4 + $0x8] sm:$0xff]
      %394 = vset.pattern.permute.xlu0 0
      %395 = vperm.xlu0 %394, %v391
      %v396 = vpop.permute.xlu0 %395
      %399 = vset.pattern.permute.xlu0 0
      %400 = vperm.xlu0 %399, %v392
      %v401 = vpop.permute.xlu0 %400
      %v403 = vadd.f32 %v396, 0.0
      %v404 = vadd.f32 %v401, 0.0
      %v405 = vld [vmem:[#allocation2] sm:$0xff]
      %v406 = vld [vmem:[#allocation2 + $0x8] sm:$0xff]
      %v407 = vld [vmem:[#allocation2 + $0x10] sm:$0xff]
      %v408 = vld [vmem:[#allocation2 + $0x20] sm:$0xff]
      %v409 = vld [vmem:[#allocation2 + $0x28] sm:$0xff]
      %v410 = vld [vmem:[#allocation2 + $0x30] sm:$0xff]
      %v412 = vperm.slane %v315, 0
      %v413 = vperm.slane %v315, 2
      %v416 = vperm.slane %v412, 0
      %v417 = vperm.slane %v413, 0
      %420 = vrot.lane.b32.xlu0 %v416, 111
      %v421 = vpop.permute.xlu0 %420
      %422 = vrot.lane.b32.xlu0 %v417, 111
      %v423 = vpop.permute.xlu0 %422
      %vm424 = vcmask 908288
      %v425 = vsel %vm424, %v421, %v423
      %v429 = vmul.f32 %v405, %v421
      %v430 = vmul.f32 %v406, %v425
      %v431 = vmul.f32 %v407, %v423
      %v432 = vmul.f32 %v408, %v421
      %v433 = vmul.f32 %v409, %v425
      %v434 = vmul.f32 %v410, %v423
      %v435 = vld [vmem:[%s3] sm:$0xf]
      %v436 = vld [vmem:[%s3 + $0x4] sm:$0xf]
      %v437 = vpack.c.bf16 %v432, %v429
      %v438 = vpack.c.bf16 %v433, %v430
      %v439 = vpack.c.bf16 %v434, %v431
      %v442 = vunpack.c.l.b16 %v435
      %v443 = vunpack.c.l.b16 %v436
      %v444 = vpack.c.b16 %v443, %v442
      %448 = vrot.lane.b32.xlu0 %v437, 17
      %v449 = vpop.permute.xlu0 %448
      %450 = vrot.lane.b32.xlu0 %v438, 17
      %v451 = vpop.permute.xlu0 %450
      %452 = vrot.lane.b32.xlu0 %v439, 17
      %v453 = vpop.permute.xlu0 %452
      %vm454 = vcmask 138240
      %v455 = vsel %vm454, %v449, %v451
      %v456 = vsel %vm454, %v451, %v453
      %vm459 = vcmask 130048
      %v461 = vsel %vm459, %v444, 0
      %463 = vmatpush.bf16.msra.mxu0 0
      %464 = vmatpush.bf16.msra.mxu0 0
      %465 = vmatpush.bf16.msra.mxu0 0
      %466 = vmatpush.bf16.msra.mxu0 0
      %467 = vmatpush.bf16.msra.mxu0 0
      %468 = vmatpush.bf16.msra.mxu0 0
      %469 = vmatpush.bf16.msra.mxu0 0
      %470 = vmatpush.bf16.msra.mxu0 %v455
      %471 = vmatmul.bf16.gmra.mxu0 %v461
      %v472 = vpop.f32.mrf.mxu0
      %v473 = vadd.f32 0.0, %v472
      %v474 = vpop.f32.mrf.mxu0
      %v475 = vadd.f32 0.0, %v474
      %476 = vdwg.mxu0
      %477 = vmatpush.bf16.msra.mxu0 0
      %478 = vmatpush.bf16.msra.mxu0 0
      %479 = vmatpush.bf16.msra.mxu0 0
      %480 = vmatpush.bf16.msra.mxu0 0
      %481 = vmatpush.bf16.msra.mxu0 0
      %482 = vmatpush.bf16.msra.mxu0 0
      %483 = vmatpush.bf16.msra.mxu0 0
      %484 = vmatpush.bf16.msra.mxu0 %v456
      %485 = vmatmul.bf16.gmra.mxu0 %v461
      %v486 = vpop.f32.mrf.mxu0
      %v487 = vadd.f32 0.0, %v486
      %v488 = vpop.f32.mrf.mxu0
      %v489 = vadd.f32 0.0, %v488
      %490 = vdwg.mxu0
      %v491 = vadd.f32 %v403, %v473
      %v492 = vadd.f32 %v403, %v487
      %v493 = vadd.f32 %v404, %v475
      %v494 = vadd.f32 %v404, %v489
      %s495 = scalar_lea.vmem %s3, 8
      %v496 = vld [vmem:[%s495] sm:$0xf]
      %v497 = vld [vmem:[%s495 + $0x4] sm:$0xf]
      %v498 = vpack.c.bf16 %v408, %v405
      %v499 = vpack.c.bf16 %v409, %v406
      %v500 = vpack.c.bf16 %v410, %v407
      %v503 = vunpack.c.l.b16 %v496
      %v504 = vunpack.c.l.b16 %v497
      %v505 = vpack.c.b16 %v504, %v503
      %509 = vrot.lane.b32.xlu0 %v498, 16
      %v510 = vpop.permute.xlu0 %509
      %511 = vrot.lane.b32.xlu0 %v499, 16
      %v512 = vpop.permute.xlu0 %511
      %513 = vrot.lane.b32.xlu0 %v500, 16
      %v514 = vpop.permute.xlu0 %513
      %vm515 = vcmask 130048
      %v516 = vsel %vm515, %v510, %v512
      %v517 = vsel %vm515, %v512, %v514
      %v521 = vsel %vm459, %v505, 0
      %523 = vmatpush.bf16.msra.mxu0 0
      %524 = vmatpush.bf16.msra.mxu0 0
      %525 = vmatpush.bf16.msra.mxu0 0
      %526 = vmatpush.bf16.msra.mxu0 0
      %527 = vmatpush.bf16.msra.mxu0 0
      %528 = vmatpush.bf16.msra.mxu0 0
      %529 = vmatpush.bf16.msra.mxu0 0
      %530 = vmatpush.bf16.msra.mxu0 %v516
      %531 = vmatmul.bf16.gmra.mxu0 %v521
      %v532 = vpop.f32.mrf.mxu0
      %v533 = vadd.f32 0.0, %v532
      %v534 = vpop.f32.mrf.mxu0
      %v535 = vadd.f32 0.0, %v534
      %536 = vdwg.mxu0
      %537 = vmatpush.bf16.msra.mxu0 0
      %538 = vmatpush.bf16.msra.mxu0 0
      %539 = vmatpush.bf16.msra.mxu0 0
      %540 = vmatpush.bf16.msra.mxu0 0
      %541 = vmatpush.bf16.msra.mxu0 0
      %542 = vmatpush.bf16.msra.mxu0 0
      %543 = vmatpush.bf16.msra.mxu0 0
      %544 = vmatpush.bf16.msra.mxu0 %v517
      %545 = vmatmul.bf16.gmra.mxu0 %v521
      %v546 = vpop.f32.mrf.mxu0
      %v547 = vadd.f32 0.0, %v546
      %v548 = vpop.f32.mrf.mxu0
      %v549 = vadd.f32 0.0, %v548
      %550 = vdwg.mxu0
      %v551 = vadd.f32 %v491, %v533
      %v552 = vadd.f32 %v492, %v547
      %v553 = vadd.f32 %v493, %v535
      %v554 = vadd.f32 %v494, %v549
      %v555 = vperm.slane %v315, 1
      %v556 = vperm.slane %v315, 3
      %v559 = vperm.slane %v555, 1
      %v560 = vperm.slane %v556, 1
      %563 = vrot.lane.b32.xlu0 %v559, 113
      %v564 = vpop.permute.xlu0 %563
      %565 = vrot.lane.b32.xlu0 %v560, 113
      %v566 = vpop.permute.xlu0 %565
      %vm567 = vcmask 924672
      %v568 = vsel %vm567, %v564, %v566
      %v572 = vmul.f32 %v405, %v564
      %v573 = vmul.f32 %v406, %v568
      %v574 = vmul.f32 %v407, %v566
      %v575 = vmul.f32 %v408, %v564
      %v576 = vmul.f32 %v409, %v568
      %v577 = vmul.f32 %v410, %v566
      %s578 = scalar_lea.vmem %s3, 16
      %v579 = vld [vmem:[%s578] sm:$0xf]
      %v580 = vld [vmem:[%s578 + $0x4] sm:$0xf]
      %v581 = vpack.c.bf16 %v575, %v572
      %v582 = vpack.c.bf16 %v576, %v573
      %v583 = vpack.c.bf16 %v577, %v574
      %v586 = vunpack.c.l.b16 %v579
      %v587 = vunpack.c.l.b16 %v580
      %v588 = vpack.c.b16 %v587, %v586
      %592 = vrot.lane.b32.xlu0 %v581, 15
      %v593 = vpop.permute.xlu0 %592
      %594 = vrot.lane.b32.xlu0 %v582, 15
      %v595 = vpop.permute.xlu0 %594
      %596 = vrot.lane.b32.xlu0 %v583, 15
      %v597 = vpop.permute.xlu0 %596
      %vm598 = vcmask 121856
      %v599 = vsel %vm598, %v593, %v595
      %v600 = vsel %vm598, %v595, %v597
      %v604 = vsel %vm459, %v588, 0
      %606 = vmatpush.bf16.msra.mxu0 0
      %607 = vmatpush.bf16.msra.mxu0 0
      %608 = vmatpush.bf16.msra.mxu0 0
      %609 = vmatpush.bf16.msra.mxu0 0
      %610 = vmatpush.bf16.msra.mxu0 0
      %611 = vmatpush.bf16.msra.mxu0 0
      %612 = vmatpush.bf16.msra.mxu0 0
      %613 = vmatpush.bf16.msra.mxu0 %v599
      %614 = vmatmul.bf16.gmra.mxu0 %v604
      %v615 = vpop.f32.mrf.mxu0
      %v616 = vadd.f32 0.0, %v615
      %v617 = vpop.f32.mrf.mxu0
      %v618 = vadd.f32 0.0, %v617
      %619 = vdwg.mxu0
      %620 = vmatpush.bf16.msra.mxu0 0
      %621 = vmatpush.bf16.msra.mxu0 0
      %622 = vmatpush.bf16.msra.mxu0 0
      %623 = vmatpush.bf16.msra.mxu0 0
      %624 = vmatpush.bf16.msra.mxu0 0
      %625 = vmatpush.bf16.msra.mxu0 0
      %626 = vmatpush.bf16.msra.mxu0 0
      %627 = vmatpush.bf16.msra.mxu0 %v600
      %628 = vmatmul.bf16.gmra.mxu0 %v604
      %v629 = vpop.f32.mrf.mxu0
      %v630 = vadd.f32 0.0, %v629
      %v631 = vpop.f32.mrf.mxu0
      %v632 = vadd.f32 0.0, %v631
      %633 = vdwg.mxu0
      %v634 = vadd.f32 %v551, %v616
      %v635 = vadd.f32 %v552, %v630
      %v636 = vadd.f32 %v553, %v618
      %v637 = vadd.f32 %v554, %v632
      %638 = vrot.lane.b32.xlu0 %v416, 127
      %v639 = vpop.permute.xlu0 %638
      %640 = vrot.lane.b32.xlu0 %v417, 127
      %v641 = vpop.permute.xlu0 %640
      %vm642 = vcmask 1039360
      %v643 = vsel %vm642, %v639, %v641
      %v647 = vmul.f32 %v405, %v639
      %v648 = vmul.f32 %v406, %v643
      %v649 = vmul.f32 %v407, %v641
      %v650 = vmul.f32 %v408, %v639
      %v651 = vmul.f32 %v409, %v643
      %v652 = vmul.f32 %v410, %v641
      %s653 = scalar_lea.vmem %s3, 24
      %v654 = vld [vmem:[%s653] sm:$0xf]
      %v655 = vld [vmem:[%s653 + $0x4] sm:$0xf]
      %v656 = vpack.c.bf16 %v650, %v647
      %v657 = vpack.c.bf16 %v651, %v648
      %v658 = vpack.c.bf16 %v652, %v649
      %v661 = vunpack.c.l.b16 %v654
      %v662 = vunpack.c.l.b16 %v655
      %v663 = vpack.c.b16 %v662, %v661
      %667 = vrot.lane.b32.xlu0 %v656, 1
      %v668 = vpop.permute.xlu0 %667
      %669 = vrot.lane.b32.xlu0 %v657, 1
      %v670 = vpop.permute.xlu0 %669
      %671 = vrot.lane.b32.xlu0 %v658, 1
      %v672 = vpop.permute.xlu0 %671
      %vm673 = vcmask 7168
      %v674 = vsel %vm673, %v668, %v670
      %v675 = vsel %vm673, %v670, %v672
      %v679 = vsel %vm459, %v663, 0
      %681 = vmatpush.bf16.msra.mxu0 0
      %682 = vmatpush.bf16.msra.mxu0 0
      %683 = vmatpush.bf16.msra.mxu0 0
      %684 = vmatpush.bf16.msra.mxu0 0
      %685 = vmatpush.bf16.msra.mxu0 0
      %686 = vmatpush.bf16.msra.mxu0 0
      %687 = vmatpush.bf16.msra.mxu0 0
      %688 = vmatpush.bf16.msra.mxu0 %v674
      %689 = vmatmul.bf16.gmra.mxu0 %v679
      %v690 = vpop.f32.mrf.mxu0
      %v691 = vadd.f32 0.0, %v690
      %v692 = vpop.f32.mrf.mxu0
      %v693 = vadd.f32 0.0, %v692
      %694 = vdwg.mxu0
      %695 = vmatpush.bf16.msra.mxu0 0
      %696 = vmatpush.bf16.msra.mxu0 0
      %697 = vmatpush.bf16.msra.mxu0 0
      %698 = vmatpush.bf16.msra.mxu0 0
      %699 = vmatpush.bf16.msra.mxu0 0
      %700 = vmatpush.bf16.msra.mxu0 0
      %701 = vmatpush.bf16.msra.mxu0 0
      %702 = vmatpush.bf16.msra.mxu0 %v675
      %703 = vmatmul.bf16.gmra.mxu0 %v679
      %v704 = vpop.f32.mrf.mxu0
      %v705 = vadd.f32 0.0, %v704
      %v706 = vpop.f32.mrf.mxu0
      %v707 = vadd.f32 0.0, %v706
      %708 = vdwg.mxu0
      %v709 = vadd.f32 %v634, %v691
      %v710 = vadd.f32 %v635, %v705
      %v711 = vadd.f32 %v636, %v693
      %v712 = vadd.f32 %v637, %v707
      %s713 = scalar_lea.vmem %s3, 32
      %v714 = vld [vmem:[%s713] sm:$0xf]
      %v715 = vld [vmem:[%s713 + $0x4] sm:$0xf]
      %v718 = vunpack.c.l.b16 %v714
      %v719 = vunpack.c.l.b16 %v715
      %v720 = vpack.c.b16 %v719, %v718
      %v722 = vsel %vm459, %v720, 0
      %724 = vmatpush.bf16.msra.mxu0 0
      %725 = vmatpush.bf16.msra.mxu0 0
      %726 = vmatpush.bf16.msra.mxu0 0
      %727 = vmatpush.bf16.msra.mxu0 0
      %728 = vmatpush.bf16.msra.mxu0 0
      %729 = vmatpush.bf16.msra.mxu0 0
      %730 = vmatpush.bf16.msra.mxu0 0
      %731 = vmatpush.bf16.msra.mxu0 %v499
      %732 = vmatmul.bf16.gmra.mxu0 %v722
      %v733 = vpop.f32.mrf.mxu0
      %v734 = vadd.f32 0.0, %v733
      %v735 = vpop.f32.mrf.mxu0
      %v736 = vadd.f32 0.0, %v735
      %737 = vdwg.mxu0
      %738 = vmatpush.bf16.msra.mxu0 0
      %739 = vmatpush.bf16.msra.mxu0 0
      %740 = vmatpush.bf16.msra.mxu0 0
      %741 = vmatpush.bf16.msra.mxu0 0
      %742 = vmatpush.bf16.msra.mxu0 0
      %743 = vmatpush.bf16.msra.mxu0 0
      %744 = vmatpush.bf16.msra.mxu0 0
      %745 = vmatpush.bf16.msra.mxu0 %v500
      %746 = vmatmul.bf16.gmra.mxu0 %v722
      %v747 = vpop.f32.mrf.mxu0
      %v748 = vadd.f32 0.0, %v747
      %v749 = vpop.f32.mrf.mxu0
      %v750 = vadd.f32 0.0, %v749
      %751 = vdwg.mxu0
      %v752 = vadd.f32 %v709, %v734
      %v753 = vadd.f32 %v710, %v748
      %v754 = vadd.f32 %v711, %v736
      %v755 = vadd.f32 %v712, %v750
      %v756 = vld [vmem:[#allocation2 + $0x8] sm:$0xff]
      %v757 = vld [vmem:[#allocation2 + $0x10] sm:$0xff]
      %v758 = vld [vmem:[#allocation2 + $0x18] sm:$0xff]
      %v759 = vld [vmem:[#allocation2 + $0x28] sm:$0xff]
      %v760 = vld [vmem:[#allocation2 + $0x30] sm:$0xff]
      %v761 = vld [vmem:[#allocation2 + $0x38] sm:$0xff]
      %762 = vrot.lane.b32.xlu0 %v559, 1
      %v763 = vpop.permute.xlu0 %762
      %764 = vrot.lane.b32.xlu0 %v560, 1
      %v765 = vpop.permute.xlu0 %764
      %vm766 = vcmask 7168
      %v767 = vsel %vm766, %v763, %v765
      %v771 = vmul.f32 %v756, %v763
      %v772 = vmul.f32 %v757, %v767
      %v773 = vmul.f32 %v758, %v765
      %v774 = vmul.f32 %v759, %v763
      %v775 = vmul.f32 %v760, %v767
      %v776 = vmul.f32 %v761, %v765
      %s777 = scalar_lea.vmem %s3, 40
      %v778 = vld [vmem:[%s777] sm:$0xf]
      %v779 = vld [vmem:[%s777 + $0x4] sm:$0xf]
      %v780 = vpack.c.bf16 %v774, %v771
      %v781 = vpack.c.bf16 %v775, %v772
      %v782 = vpack.c.bf16 %v776, %v773
      %v785 = vunpack.c.l.b16 %v778
      %v786 = vunpack.c.l.b16 %v779
      %v787 = vpack.c.b16 %v786, %v785
      %791 = vrot.lane.b32.xlu0 %v780, 127
      %v792 = vpop.permute.xlu0 %791
      %793 = vrot.lane.b32.xlu0 %v781, 127
      %v794 = vpop.permute.xlu0 %793
      %795 = vrot.lane.b32.xlu0 %v782, 127
      %v796 = vpop.permute.xlu0 %795
      %vm797 = vcmask 1039360
      %v798 = vsel %vm797, %v792, %v794
      %v799 = vsel %vm797, %v794, %v796
      %v803 = vsel %vm459, %v787, 0
      %805 = vmatpush.bf16.msra.mxu0 0
      %806 = vmatpush.bf16.msra.mxu0 0
      %807 = vmatpush.bf16.msra.mxu0 0
      %808 = vmatpush.bf16.msra.mxu0 0
      %809 = vmatpush.bf16.msra.mxu0 0
      %810 = vmatpush.bf16.msra.mxu0 0
      %811 = vmatpush.bf16.msra.mxu0 0
      %812 = vmatpush.bf16.msra.mxu0 %v798
      %813 = vmatmul.bf16.gmra.mxu0 %v803
      %v814 = vpop.f32.mrf.mxu0
      %v815 = vadd.f32 0.0, %v814
      %v816 = vpop.f32.mrf.mxu0
      %v817 = vadd.f32 0.0, %v816
      %818 = vdwg.mxu0
      %819 = vmatpush.bf16.msra.mxu0 0
      %820 = vmatpush.bf16.msra.mxu0 0
      %821 = vmatpush.bf16.msra.mxu0 0
      %822 = vmatpush.bf16.msra.mxu0 0
      %823 = vmatpush.bf16.msra.mxu0 0
      %824 = vmatpush.bf16.msra.mxu0 0
      %825 = vmatpush.bf16.msra.mxu0 0
      %826 = vmatpush.bf16.msra.mxu0 %v799
      %827 = vmatmul.bf16.gmra.mxu0 %v803
      %v828 = vpop.f32.mrf.mxu0
      %v829 = vadd.f32 0.0, %v828
      %v830 = vpop.f32.mrf.mxu0
      %v831 = vadd.f32 0.0, %v830
      %832 = vdwg.mxu0
      %v833 = vadd.f32 %v752, %v815
      %v834 = vadd.f32 %v753, %v829
      %v835 = vadd.f32 %v754, %v817
      %v836 = vadd.f32 %v755, %v831
      %837 = vrot.lane.b32.xlu0 %v416, 15
      %v838 = vpop.permute.xlu0 %837
      %839 = vrot.lane.b32.xlu0 %v417, 15
      %v840 = vpop.permute.xlu0 %839
      %vm841 = vcmask 121856
      %v842 = vsel %vm841, %v838, %v840
      %v846 = vmul.f32 %v756, %v838
      %v847 = vmul.f32 %v757, %v842
      %v848 = vmul.f32 %v758, %v840
      %v849 = vmul.f32 %v759, %v838
      %v850 = vmul.f32 %v760, %v842
      %v851 = vmul.f32 %v761, %v840
      %s852 = scalar_lea.vmem %s3, 48
      %v853 = vld [vmem:[%s852] sm:$0xf]
      %v854 = vld [vmem:[%s852 + $0x4] sm:$0xf]
      %v855 = vpack.c.bf16 %v849, %v846
      %v856 = vpack.c.bf16 %v850, %v847
      %v857 = vpack.c.bf16 %v851, %v848
      %v860 = vunpack.c.l.b16 %v853
      %v861 = vunpack.c.l.b16 %v854
      %v862 = vpack.c.b16 %v861, %v860
      %866 = vrot.lane.b32.xlu0 %v855, 113
      %v867 = vpop.permute.xlu0 %866
      %868 = vrot.lane.b32.xlu0 %v856, 113
      %v869 = vpop.permute.xlu0 %868
      %870 = vrot.lane.b32.xlu0 %v857, 113
      %v871 = vpop.permute.xlu0 %870
      %vm872 = vcmask 924672
      %v873 = vsel %vm872, %v867, %v869
      %v874 = vsel %vm872, %v869, %v871
      %v878 = vsel %vm459, %v862, 0
      %880 = vmatpush.bf16.msra.mxu0 0
      %881 = vmatpush.bf16.msra.mxu0 0
      %882 = vmatpush.bf16.msra.mxu0 0
      %883 = vmatpush.bf16.msra.mxu0 0
      %884 = vmatpush.bf16.msra.mxu0 0
      %885 = vmatpush.bf16.msra.mxu0 0
      %886 = vmatpush.bf16.msra.mxu0 0
      %887 = vmatpush.bf16.msra.mxu0 %v873
      %888 = vmatmul.bf16.gmra.mxu0 %v878
      %v889 = vpop.f32.mrf.mxu0
      %v890 = vadd.f32 0.0, %v889
      %v891 = vpop.f32.mrf.mxu0
      %v892 = vadd.f32 0.0, %v891
      %893 = vdwg.mxu0
      %894 = vmatpush.bf16.msra.mxu0 0
      %895 = vmatpush.bf16.msra.mxu0 0
      %896 = vmatpush.bf16.msra.mxu0 0
      %897 = vmatpush.bf16.msra.mxu0 0
      %898 = vmatpush.bf16.msra.mxu0 0
      %899 = vmatpush.bf16.msra.mxu0 0
      %900 = vmatpush.bf16.msra.mxu0 0
      %901 = vmatpush.bf16.msra.mxu0 %v874
      %902 = vmatmul.bf16.gmra.mxu0 %v878
      %v903 = vpop.f32.mrf.mxu0
      %v904 = vadd.f32 0.0, %v903
      %v905 = vpop.f32.mrf.mxu0
      %v906 = vadd.f32 0.0, %v905
      %907 = vdwg.mxu0
      %v908 = vadd.f32 %v833, %v890
      %v909 = vadd.f32 %v834, %v904
      %v910 = vadd.f32 %v835, %v892
      %v911 = vadd.f32 %v836, %v906
      %s912 = scalar_lea.vmem %s3, 56
      %v913 = vld [vmem:[%s912] sm:$0xf]
      %v914 = vld [vmem:[%s912 + $0x4] sm:$0xf]
      %v915 = vpack.c.bf16 %v759, %v756
      %v916 = vpack.c.bf16 %v760, %v757
      %v917 = vpack.c.bf16 %v761, %v758
      %v920 = vunpack.c.l.b16 %v913
      %v921 = vunpack.c.l.b16 %v914
      %v922 = vpack.c.b16 %v921, %v920
      %926 = vrot.lane.b32.xlu0 %v915, 112
      %v927 = vpop.permute.xlu0 %926
      %928 = vrot.lane.b32.xlu0 %v916, 112
      %v929 = vpop.permute.xlu0 %928
      %930 = vrot.lane.b32.xlu0 %v917, 112
      %v931 = vpop.permute.xlu0 %930
      %vm932 = vcmask 916480
      %v933 = vsel %vm932, %v927, %v929
      %v934 = vsel %vm932, %v929, %v931
      %v938 = vsel %vm459, %v922, 0
      %940 = vmatpush.bf16.msra.mxu0 0
      %941 = vmatpush.bf16.msra.mxu0 0
      %942 = vmatpush.bf16.msra.mxu0 0
      %943 = vmatpush.bf16.msra.mxu0 0
      %944 = vmatpush.bf16.msra.mxu0 0
      %945 = vmatpush.bf16.msra.mxu0 0
      %946 = vmatpush.bf16.msra.mxu0 0
      %947 = vmatpush.bf16.msra.mxu0 %v933
      %948 = vmatmul.bf16.gmra.mxu0 %v938
      %v949 = vpop.f32.mrf.mxu0
      %v950 = vadd.f32 0.0, %v949
      %v951 = vpop.f32.mrf.mxu0
      %v952 = vadd.f32 0.0, %v951
      %953 = vdwg.mxu0
      %954 = vmatpush.bf16.msra.mxu0 0
      %955 = vmatpush.bf16.msra.mxu0 0
      %956 = vmatpush.bf16.msra.mxu0 0
      %957 = vmatpush.bf16.msra.mxu0 0
      %958 = vmatpush.bf16.msra.mxu0 0
      %959 = vmatpush.bf16.msra.mxu0 0
      %960 = vmatpush.bf16.msra.mxu0 0
      %961 = vmatpush.bf16.msra.mxu0 %v934
      %962 = vmatmul.bf16.gmra.mxu0 %v938
      %v963 = vpop.f32.mrf.mxu0
      %v964 = vadd.f32 0.0, %v963
      %v965 = vpop.f32.mrf.mxu0
      %v966 = vadd.f32 0.0, %v965
      %967 = vdwg.mxu0
      %v968 = vadd.f32 %v908, %v950
      %v969 = vadd.f32 %v909, %v964
      %v970 = vadd.f32 %v910, %v952
      %v971 = vadd.f32 %v911, %v966
      %972 = vrot.lane.b32.xlu0 %v559, 17
      %v973 = vpop.permute.xlu0 %972
      %974 = vrot.lane.b32.xlu0 %v560, 17
      %v975 = vpop.permute.xlu0 %974
      %vm976 = vcmask 138240
      %v977 = vsel %vm976, %v973, %v975
      %v981 = vmul.f32 %v756, %v973
      %v982 = vmul.f32 %v757, %v977
      %v983 = vmul.f32 %v758, %v975
      %v984 = vmul.f32 %v759, %v973
      %v985 = vmul.f32 %v760, %v977
      %v986 = vmul.f32 %v761, %v975
      %s987 = scalar_lea.vmem %s3, 64
      %v988 = vld [vmem:[%s987] sm:$0xf]
      %v989 = vld [vmem:[%s987 + $0x4] sm:$0xf]
      %v990 = vpack.c.bf16 %v984, %v981
      %v991 = vpack.c.bf16 %v985, %v982
      %v992 = vpack.c.bf16 %v986, %v983
      %v995 = vunpack.c.l.b16 %v988
      %v996 = vunpack.c.l.b16 %v989
      %v997 = vpack.c.b16 %v996, %v995
      %1001 = vrot.lane.b32.xlu0 %v990, 111
      %v1002 = vpop.permute.xlu0 %1001
      %1003 = vrot.lane.b32.xlu0 %v991, 111
      %v1004 = vpop.permute.xlu0 %1003
      %1005 = vrot.lane.b32.xlu0 %v992, 111
      %v1006 = vpop.permute.xlu0 %1005
      %vm1007 = vcmask 908288
      %v1008 = vsel %vm1007, %v1002, %v1004
      %v1009 = vsel %vm1007, %v1004, %v1006
      %v1013 = vsel %vm459, %v997, 0
      %1015 = vmatpush.bf16.msra.mxu0 0
      %1016 = vmatpush.bf16.msra.mxu0 0
      %1017 = vmatpush.bf16.msra.mxu0 0
      %1018 = vmatpush.bf16.msra.mxu0 0
      %1019 = vmatpush.bf16.msra.mxu0 0
      %1020 = vmatpush.bf16.msra.mxu0 0
      %1021 = vmatpush.bf16.msra.mxu0 0
      %1022 = vmatpush.bf16.msra.mxu0 %v1008
      %1023 = vmatmul.bf16.gmra.mxu0 %v1013
      %v1024 = vpop.f32.mrf.mxu0
      %v1025 = vadd.f32 0.0, %v1024
      %v1026 = vpop.f32.mrf.mxu0
      %v1027 = vadd.f32 0.0, %v1026
      %1028 = vdwg.mxu0
      %1029 = vmatpush.bf16.msra.mxu0 0
      %1030 = vmatpush.bf16.msra.mxu0 0
      %1031 = vmatpush.bf16.msra.mxu0 0
      %1032 = vmatpush.bf16.msra.mxu0 0
      %1033 = vmatpush.bf16.msra.mxu0 0
      %1034 = vmatpush.bf16.msra.mxu0 0
      %1035 = vmatpush.bf16.msra.mxu0 0
      %1036 = vmatpush.bf16.msra.mxu0 %v1009
      %1037 = vmatmul.bf16.gmra.mxu0 %v1013
      %v1038 = vpop.f32.mrf.mxu0
      %v1039 = vadd.f32 0.0, %v1038
      %v1040 = vpop.f32.mrf.mxu0
      %v1041 = vadd.f32 0.0, %v1040
      %1042 = vdwg.mxu0
      %v1043 = vadd.f32 %v968, %v1025
      %v1044 = vadd.f32 %v969, %v1039
      %v1045 = vadd.f32 %v970, %v1027
      %v1046 = vadd.f32 %v971, %v1041
      %v1047 = vmax.f32 %v1043, 0.0
      %v1048 = vmax.f32 %v1044, 0.0
      %v1049 = vmax.f32 %v1045, 0.0
      %v1050 = vmax.f32 %v1046, 0.0
      %v1051 = vmin.f32 %v1047, 6.0
      %v1052 = vmin.f32 %v1048, 6.0
      %v1053 = vmin.f32 %v1049, 6.0
      %v1054 = vmin.f32 %v1050, 6.0
      %v1055 = vld [vmem:[%s5] sm:$0xf]
      %v1056 = vld [vmem:[%s5 + $0x4] sm:$0xf]
      %v1057 = vld [vmem:[%s5 + $0x8] sm:$0xf]
      %v1058 = vld [vmem:[%s5 + $0xc] sm:$0xf]
      %v1059 = vpack.c.bf16 %v1053, %v1051
      %v1060 = vpack.c.bf16 %v1054, %v1052
      %v1061 = vld [vmem:[%s6] sm:$0xff]
      %v1062 = vld [vmem:[%s6 + $0x8] sm:$0xff]
      %v1063 = vld [vmem:[%s6 + $0x10] sm:$0xff]
      %v1064 = vld [vmem:[%s6 + $0x18] sm:$0xff]
      %1066 = vset.pattern.permute.xlu0 0
      %1067 = vperm.xlu0 %1066, %v1061
      %v1068 = vpop.permute.xlu0 %1067
      %1071 = vset.pattern.permute.xlu0 0
      %1072 = vperm.xlu0 %1071, %v1062
      %v1073 = vpop.permute.xlu0 %1072
      %1076 = vset.pattern.permute.xlu0 0
      %1077 = vperm.xlu0 %1076, %v1063
      %v1078 = vpop.permute.xlu0 %1077
      %1081 = vset.pattern.permute.xlu0 0
      %1082 = vperm.xlu0 %1081, %v1064
      %v1083 = vpop.permute.xlu0 %1082
      %v1089 = vunpack.c.l.b16 %v1055
      %v1090 = vunpack.c.l.b16 %v1056
      %v1091 = vunpack.c.l.b16 %v1057
      %v1092 = vunpack.c.l.b16 %v1058
      %v1093 = vpack.c.b16 %v1090, %v1089
      %v1094 = vpack.c.b16 %v1092, %v1091
      %v1096 = vsel %vm459, %v1093, 0
      %v1099 = vsel %vm459, %v1094, 0
      %1101 = vmatpush.bf16.msra.mxu0 0
      %1102 = vmatpush.bf16.msra.mxu0 0
      %1103 = vmatpush.bf16.msra.mxu0 0
      %1104 = vmatpush.bf16.msra.mxu0 0
      %1105 = vmatpush.bf16.msra.mxu0 0
      %1106 = vmatpush.bf16.msra.mxu0 0
      %1107 = vmatpush.bf16.msra.mxu0 0
      %1108 = vmatpush.bf16.msra.mxu0 %v1059
      %1109 = vmatmul.bf16.gmra.mxu0 %v1096
      %v1110 = vpop.f32.mrf.mxu0
      %v1111 = vadd.f32 %v1068, %v1110
      %v1112 = vpop.f32.mrf.mxu0
      %v1113 = vadd.f32 %v1073, %v1112
      %1114 = vmatmul.bf16.gmra.mxu0 %v1099
      %v1115 = vpop.f32.mrf.mxu0
      %v1116 = vadd.f32 %v1078, %v1115
      %v1117 = vpop.f32.mrf.mxu0
      %v1118 = vadd.f32 %v1083, %v1117
      %1119 = vdwg.mxu0
      %1120 = vmatpush.bf16.msra.mxu0 0
      %1121 = vmatpush.bf16.msra.mxu0 0
      %1122 = vmatpush.bf16.msra.mxu0 0
      %1123 = vmatpush.bf16.msra.mxu0 0
      %1124 = vmatpush.bf16.msra.mxu0 0
      %1125 = vmatpush.bf16.msra.mxu0 0
      %1126 = vmatpush.bf16.msra.mxu0 0
      %1127 = vmatpush.bf16.msra.mxu0 %v1060
      %1128 = vmatmul.bf16.gmra.mxu0 %v1096
      %v1129 = vpop.f32.mrf.mxu0
      %v1130 = vadd.f32 %v1068, %v1129
      %v1131 = vpop.f32.mrf.mxu0
      %v1132 = vadd.f32 %v1073, %v1131
      %1133 = vmatmul.bf16.gmra.mxu0 %v1099
      %v1134 = vpop.f32.mrf.mxu0
      %v1135 = vadd.f32 %v1078, %v1134
      %v1136 = vpop.f32.mrf.mxu0
      %v1137 = vadd.f32 %v1083, %v1136
      %1138 = vdwg.mxu0
      %v1139 = vadd.f32 %v1111, %v307
      %v1140 = vadd.f32 %v1130, %v308
      %v1141 = vadd.f32 %v1113, %v309
      %v1142 = vadd.f32 %v1132, %v310
      %v1143 = vadd.f32 %v1116, %v311
      %v1144 = vadd.f32 %v1135, %v312
      %v1145 = vadd.f32 %v1118, %v313
      %v1146 = vadd.f32 %v1137, %v314
      %v1147 = vmax.f32 %v1139, 0.0
      %v1148 = vmax.f32 %v1140, 0.0
      %v1149 = vmax.f32 %v1141, 0.0
      %v1150 = vmax.f32 %v1142, 0.0
      %v1151 = vmax.f32 %v1143, 0.0
      %v1152 = vmax.f32 %v1144, 0.0
      %v1153 = vmax.f32 %v1145, 0.0
      %v1154 = vmax.f32 %v1146, 0.0
      %v1155 = vmin.f32 %v1147, 6.0
      %v1156 = vmin.f32 %v1148, 6.0
      %v1157 = vmin.f32 %v1149, 6.0
      %v1158 = vmin.f32 %v1150, 6.0
      %v1159 = vmin.f32 %v1151, 6.0
      %v1160 = vmin.f32 %v1152, 6.0
      %v1161 = vmin.f32 %v1153, 6.0
      %v1162 = vmin.f32 %v1154, 6.0
      %1163 = vst [vmem:[%s305] sm:$0xff] %v1155
      %1164 = vst [vmem:[%s305 + $0x8] sm:$0xff] %v1156
      %1165 = vst [vmem:[%s305 + $0x10] sm:$0xff] %v1157
      %1166 = vst [vmem:[%s305 + $0x18] sm:$0xff] %v1158
      %1167 = vst [vmem:[%s305 + $0x20] sm:$0xff] %v1159
      %1168 = vst [vmem:[%s305 + $0x28] sm:$0xff] %v1160
      %1169 = vst [vmem:[%s305 + $0x30] sm:$0xff] %v1161
      %1170 = vst [vmem:[%s305 + $0x38] sm:$0xff] %v1162
      %p1171 = scmp.lt.s32.totalorder %s19, 1
      %s1172 = scalar_select %p1171, %s19, 1
      %s1173 = smul.addr %s1172, 8
      %s1174 = smul.addr %s1173, 8
      %s1175 = scalar_lea.vmem %s8, %s1174
      // Predicated region
      $region53: #{shufflenet_unit.1} parent=51 // pred_check
        %p1176 = pneg %p210
      $region54: #{shufflenet_unit.1} parent=51 // pred_check_branch
        %1178 = sbr.rel (%p1176) target = $region56
      $region55: #{shufflenet_unit.1} parent=51 // pred_region
        _
      $region56: #{shufflenet_unit.1} parent=51 // pred_fallthru
        _
    $region52: #{shufflenet_unit.1} parent=5 // pred_fallthru
      _
    %p1179 = scmp.le.s32.totalorder 2, %s14
    // Predicated region
    $region57: #{shufflenet_unit.1} parent=5 // pred_check
      %p1180 = pneg %p1179
    $region58: #{shufflenet_unit.1} parent=5 // pred_check_branch
      %1182 = sbr.rel (%p1180) target = $region60
    $region59: #{shufflenet_unit.1} parent=5 // pred_region
      %s1183 = ssub.s32 %s14, 2
      // Predicated region
      $region61: #{shufflenet_unit.1} parent=59 // pred_check
        %p1184 = pneg %p216
      $region62: #{shufflenet_unit.1} parent=59 // pred_check_branch
        %1186 = sbr.rel (%p1184) target = $region64
      $region63: #{shufflenet_unit.1} parent=59 // pred_region
        %p1187 = scmp.lt.s32.totalorder %s20, 1
        %s1188 = scalar_select %p1187, %s20, 1
        %s1189 = smul.addr %s1188, 8
        %s1190 = smul.addr %s1189, 8
        %s1191 = scalar_lea.vmem %s8, %s1190
      $region64: #{shufflenet_unit.1} parent=59 // pred_fallthru
        _
    $region60: #{shufflenet_unit.1} parent=5 // pred_fallthru
      _
  $region6: #{shufflenet_unit.1} parent=0 // loop_footer
    %s18 = sadd.s32 1, %s14
  $region7: #{shufflenet_unit.1} parent=0 // loop_footer_branch
    %13 = sbr.rel target = $region3
  $region8: #{shufflenet_unit.1} parent=0 // loop_exit
    _

</llo_original>
